<compile_context>
chip_gen: v7x
topology: tpu7x:2x2x1
jax: 0.10.0
libtpu: 0.0.40
codegen_flags: <defaults>
</compile_context>

<pallas_src>
import jax
import jax.numpy as jnp
from jax.experimental import pallas as pl
from jax.experimental.pallas import tpu as pltpu

# ---------------- problem sizes (small, consistent with the module) ----------
B, C, H, W = 2, 4, 16, 16          # input images, NCHW
KH = KW = 3                        # conv kernel
FEAT = 64                          # base_model.fc.in_features (synthetic)
HIDDEN = 2048                      # projection head hidden width (fixed by module)
OUT = 128                          # out_features
KDIM = KH * KW * C                 # im2col patch length (36)
KPAD = 128                         # lane-dense padded contraction dim
HW = H * W


# ------------- Pallas kernel: conv + relu + avgpool + fused MLP head ---------
def simclr_kernel(patches_ref, wc_ref, bc_ref, w1_ref, b1_ref, w2_ref, b2_ref,
                  out_ref):
    # conv as matmul over im2col patches (bf16 in, f32 accumulate) + bias, ReLU
    conv = jnp.dot(patches_ref[...], wc_ref[...],
                   preferred_element_type=jnp.float32)
    conv = jnp.maximum(conv + bc_ref[...], 0.0)                  # (B*HW, FEAT) f32
    # global average pool + flatten: per-image mean over the HW rows
    feat = jnp.mean(conv.reshape(B, HW, FEAT), axis=1)           # (B, FEAT) f32
    # projection head: Linear -> ReLU -> Linear (biases fused in-kernel)
    h = jnp.dot(feat.astype(jnp.bfloat16), w1_ref[...],
                preferred_element_type=jnp.float32) + b1_ref[...]
    h = jnp.maximum(h, 0.0)                                      # (B, HIDDEN) f32
    out_ref[...] = jnp.dot(h.astype(jnp.bfloat16), w2_ref[...],
                           preferred_element_type=jnp.float32) + b2_ref[...]


def simclr_forward(x_nchw, params):
    """x_nchw: (B, C, H, W) float32.  Returns (B, OUT) float32."""
    wc, bc, w1, b1, w2, b2 = params

    # --- glue: NCHW -> NHWC -> im2col patches, K zero-padded to 128 lanes ---
    x = jnp.transpose(x_nchw, (0, 2, 3, 1))                      # NHWC
    xp = jnp.pad(x, ((0, 0), (1, 1), (1, 1), (0, 0)))            # pad=1
    taps = [xp[:, di:di + H, dj:dj + W, :] for di in range(KH) for dj in range(KW)]
    patches = jnp.concatenate(taps, axis=-1).reshape(B * HW, KDIM)
    patches = jnp.pad(patches, ((0, 0), (0, KPAD - KDIM))).astype(jnp.bfloat16)
    wc_p = jnp.pad(wc, ((0, KPAD - KDIM), (0, 0))).astype(jnp.bfloat16)
    w1_b = w1.astype(jnp.bfloat16)
    w2_b = w2.astype(jnp.bfloat16)

    return pl.pallas_call(
        simclr_kernel,
        out_shape=jax.ShapeDtypeStruct((B, OUT), jnp.float32),
        grid=(1,),
        in_specs=[
            pl.BlockSpec((B * HW, KPAD), lambda i: (0, 0)),      # patches (bf16)
            pl.BlockSpec((KPAD, FEAT), lambda i: (0, 0)),        # conv weight (bf16)
            pl.BlockSpec((1, FEAT), lambda i: (0, 0)),           # conv bias (f32)
            pl.BlockSpec((FEAT, HIDDEN), lambda i: (0, 0)),      # W1 (bf16)
            pl.BlockSpec((1, HIDDEN), lambda i: (0, 0)),         # b1 (f32)
            pl.BlockSpec((HIDDEN, OUT), lambda i: (0, 0)),       # W2 (bf16)
            pl.BlockSpec((1, OUT), lambda i: (0, 0)),            # b2 (f32)
        ],
        out_specs=pl.BlockSpec((B, OUT), lambda i: (0, 0)),
        compiler_params=pltpu.CompilerParams(
            dimension_semantics=("arbitrary",),
            vmem_limit_bytes=32 * 1024 * 1024),
    )(patches, wc_p, bc, w1_b, b1, w2_b, b2)


# ---------------- deterministic parameter init (f32 master copies) -----------
def init_params(key):
    ks = jax.random.split(key, 6)
    wc = jax.random.normal(ks[0], (KDIM, FEAT), jnp.float32) * (1.0 / KDIM) ** 0.5
    bc = jax.random.normal(ks[1], (1, FEAT), jnp.float32) * 0.01
    w1 = jax.random.normal(ks[2], (FEAT, HIDDEN), jnp.float32) * (1.0 / FEAT) ** 0.5
    b1 = jax.random.normal(ks[3], (1, HIDDEN), jnp.float32) * 0.01
    w2 = jax.random.normal(ks[4], (HIDDEN, OUT), jnp.float32) * (1.0 / HIDDEN) ** 0.5
    b2 = jax.random.normal(ks[5], (1, OUT), jnp.float32) * 0.01
    return (wc, bc, w1, b1, w2, b2)


# ---------------- pure-JAX f32 reference for verification --------------------
def reference_forward(x_nchw, params):
    wc, bc, w1, b1, w2, b2 = params
    x = jnp.transpose(x_nchw, (0, 2, 3, 1))
    xp = jnp.pad(x, ((0, 0), (1, 1), (1, 1), (0, 0)))
    taps = [xp[:, di:di + H, dj:dj + W, :] for di in range(KH) for dj in range(KW)]
    patches = jnp.concatenate(taps, axis=-1).reshape(B, HW, KDIM)
    conv = jnp.maximum(jnp.einsum("bpk,kf->bpf", patches, wc) + bc[0], 0.0)
    feat = conv.mean(axis=1)                                     # global avg pool + flatten
    h = jnp.maximum(feat @ w1 + b1[0], 0.0)
    return h @ w2 + b2[0]


if __name__ == "__main__":
    key = jax.random.PRNGKey(0)
    k_x, k_p = jax.random.split(key)
    x = jax.random.normal(k_x, (B, C, H, W), jnp.float32)        # NCHW, like PyTorch
    params = init_params(k_p)

    fwd = jax.jit(simclr_forward)
    out = fwd(x, params)
    out = jax.block_until_ready(out)

    ref = reference_forward(x, params)
    assert out.shape == (B, OUT)
    # bf16 weights/activations with f32 accumulation: ~1e-3 abs error expected
    assert jnp.allclose(out, ref, atol=3e-2, rtol=3e-2), "mismatch vs JAX reference"
    print("KERNEL_OK")
</pallas_src>

<mosaic_0001>
module attributes {stable_mosaic.version = 11 : i64} {
  func.func @simclr_kernel(%arg0: i32, %arg1: memref<512x128xbf16, #tpu.memory_space<vmem>>, %arg2: memref<128x64xbf16, #tpu.memory_space<vmem>>, %arg3: memref<1x64xf32, #tpu.memory_space<vmem>>, %arg4: memref<64x2048xbf16, #tpu.memory_space<vmem>>, %arg5: memref<1x2048xf32, #tpu.memory_space<vmem>>, %arg6: memref<2048x128xbf16, #tpu.memory_space<vmem>>, %arg7: memref<1x128xf32, #tpu.memory_space<vmem>>, %arg8: memref<2x128xf32, #tpu.memory_space<vmem>>) attributes {dimension_semantics = [#tpu.dimension_semantics<arbitrary>], iteration_bounds = array<i64: 1>, scalar_prefetch = 0 : i64, scratch_operands = 0 : i64, tpu.core_type = #tpu.core_type<tc>, window_params = [{pipeline_mode = #tpu.pipeline_mode<synchronous>, transform_indices = @transform_0, window_bounds = array<i64: 512, 128>}, {pipeline_mode = #tpu.pipeline_mode<synchronous>, transform_indices = @transform_1, window_bounds = array<i64: 128, 64>}, {pipeline_mode = #tpu.pipeline_mode<synchronous>, transform_indices = @transform_2, window_bounds = array<i64: 1, 64>}, {pipeline_mode = #tpu.pipeline_mode<synchronous>, transform_indices = @transform_3, window_bounds = array<i64: 64, 2048>}, {pipeline_mode = #tpu.pipeline_mode<synchronous>, transform_indices = @transform_4, window_bounds = array<i64: 1, 2048>}, {pipeline_mode = #tpu.pipeline_mode<synchronous>, transform_indices = @transform_5, window_bounds = array<i64: 2048, 128>}, {pipeline_mode = #tpu.pipeline_mode<synchronous>, transform_indices = @transform_6, window_bounds = array<i64: 1, 128>}, {pipeline_mode = #tpu.pipeline_mode<synchronous>, transform_indices = @transform_7, window_bounds = array<i64: 2, 128>}]} {
    %c0 = arith.constant 0 : index
    %c0_0 = arith.constant 0 : index
    %0 = vector.load %arg1[%c0, %c0_0] : memref<512x128xbf16, #tpu.memory_space<vmem>>, vector<512x128xbf16>
    %c0_1 = arith.constant 0 : index
    %c0_2 = arith.constant 0 : index
    %1 = vector.load %arg2[%c0_1, %c0_2] : memref<128x64xbf16, #tpu.memory_space<vmem>>, vector<128x64xbf16>
    %cst = arith.constant dense<0.000000e+00> : vector<512x64xf32>
    %2 = tpu.matmul %0, %1, %cst {dimension_numbers = #tpu.dot_dimension_numbers<[1], [0], [0], [1], [0, 0, 1, 1], [], []>} : vector<512x128xbf16>, vector<128x64xbf16>, vector<512x64xf32> -> vector<512x64xf32>
    %c0_3 = arith.constant 0 : index
    %c0_4 = arith.constant 0 : index
    %3 = vector.load %arg3[%c0_3, %c0_4] : memref<1x64xf32, #tpu.memory_space<vmem>>, vector<1x64xf32>
    %4 = vector.broadcast %3 : vector<1x64xf32> to vector<512x64xf32>
    %5 = arith.addf %2, %4 : vector<512x64xf32>
    %cst_5 = arith.constant 0.000000e+00 : f32
    %6 = vector.broadcast %cst_5 : f32 to vector<512x64xf32>
    %7 = arith.maximumf %5, %6 : vector<512x64xf32>
    %8 = vector.shape_cast %7 : vector<512x64xf32> to vector<2x256x64xf32>
    %cst_6 = arith.constant dense<0.000000e+00> : vector<2x64xf32>
    %9 = vector.multi_reduction <add>, %8, %cst_6 [1] : vector<2x256x64xf32> to vector<2x64xf32>
    %cst_7 = arith.constant 2.560000e+02 : f32
    %10 = vector.broadcast %cst_7 : f32 to vector<2x64xf32>
    %11 = arith.divf %9, %10 : vector<2x64xf32>
    %12 = arith.truncf %11 : vector<2x64xf32> to vector<2x64xbf16>
    %c0_8 = arith.constant 0 : index
    %c0_9 = arith.constant 0 : index
    %13 = vector.load %arg4[%c0_8, %c0_9] : memref<64x2048xbf16, #tpu.memory_space<vmem>>, vector<64x2048xbf16>
    %cst_10 = arith.constant dense<0.000000e+00> : vector<2x2048xf32>
    %14 = tpu.matmul %12, %13, %cst_10 {dimension_numbers = #tpu.dot_dimension_numbers<[1], [0], [0], [1], [0, 0, 1, 1], [], []>} : vector<2x64xbf16>, vector<64x2048xbf16>, vector<2x2048xf32> -> vector<2x2048xf32>
    %c0_11 = arith.constant 0 : index
    %c0_12 = arith.constant 0 : index
    %15 = vector.load %arg5[%c0_11, %c0_12] : memref<1x2048xf32, #tpu.memory_space<vmem>>, vector<1x2048xf32>
    %16 = vector.broadcast %15 : vector<1x2048xf32> to vector<2x2048xf32>
    %17 = arith.addf %14, %16 : vector<2x2048xf32>
    %cst_13 = arith.constant 0.000000e+00 : f32
    %18 = vector.broadcast %cst_13 : f32 to vector<2x2048xf32>
    %19 = arith.maximumf %17, %18 : vector<2x2048xf32>
    %20 = arith.truncf %19 : vector<2x2048xf32> to vector<2x2048xbf16>
    %c0_14 = arith.constant 0 : index
    %c0_15 = arith.constant 0 : index
    %21 = vector.load %arg6[%c0_14, %c0_15] : memref<2048x128xbf16, #tpu.memory_space<vmem>>, vector<2048x128xbf16>
    %cst_16 = arith.constant dense<0.000000e+00> : vector<2x128xf32>
    %22 = tpu.matmul %20, %21, %cst_16 {dimension_numbers = #tpu.dot_dimension_numbers<[1], [0], [0], [1], [0, 0, 1, 1], [], []>} : vector<2x2048xbf16>, vector<2048x128xbf16>, vector<2x128xf32> -> vector<2x128xf32>
    %c0_17 = arith.constant 0 : index
    %c0_18 = arith.constant 0 : index
    %23 = vector.load %arg7[%c0_17, %c0_18] : memref<1x128xf32, #tpu.memory_space<vmem>>, vector<1x128xf32>
    %24 = vector.broadcast %23 : vector<1x128xf32> to vector<2x128xf32>
    %25 = arith.addf %22, %24 : vector<2x128xf32>
    %c0_19 = arith.constant 0 : index
    %c0_20 = arith.constant 0 : index
    %26 = vector.load %arg8[%c0_19, %c0_20] : memref<2x128xf32, #tpu.memory_space<vmem>>, vector<2x128xf32>
    tpu.vector_store %arg8[%c0_19, %c0_20], %25 {strides = array<i32>} : memref<2x128xf32, #tpu.memory_space<vmem>>, vector<2x128xf32>,
    return
  }
  func.func @transform_0(%arg0: i32) -> (i32, i32) {
    %c0_i32 = arith.constant 0 : i32
    %c0_i32_0 = arith.constant 0 : i32
    %c0_i32_1 = arith.constant 0 : i32
    return %c0_i32, %c0_i32_0 : i32, i32
  }
  func.func @transform_1(%arg0: i32) -> (i32, i32) {
    %c0_i32 = arith.constant 0 : i32
    %c0_i32_0 = arith.constant 0 : i32
    %c0_i32_1 = arith.constant 0 : i32
    return %c0_i32, %c0_i32_0 : i32, i32
  }
  func.func @transform_2(%arg0: i32) -> (i32, i32) {
    %c0_i32 = arith.constant 0 : i32
    %c0_i32_0 = arith.constant 0 : i32
    %c0_i32_1 = arith.constant 0 : i32
    return %c0_i32, %c0_i32_0 : i32, i32
  }
  func.func @transform_3(%arg0: i32) -> (i32, i32) {
    %c0_i32 = arith.constant 0 : i32
    %c0_i32_0 = arith.constant 0 : i32
    %c0_i32_1 = arith.constant 0 : i32
    return %c0_i32, %c0_i32_0 : i32, i32
  }
  func.func @transform_4(%arg0: i32) -> (i32, i32) {
    %c0_i32 = arith.constant 0 : i32
    %c0_i32_0 = arith.constant 0 : i32
    %c0_i32_1 = arith.constant 0 : i32
    return %c0_i32, %c0_i32_0 : i32, i32
  }
  func.func @transform_5(%arg0: i32) -> (i32, i32) {
    %c0_i32 = arith.constant 0 : i32
    %c0_i32_0 = arith.constant 0 : i32
    %c0_i32_1 = arith.constant 0 : i32
    return %c0_i32, %c0_i32_0 : i32, i32
  }
  func.func @transform_6(%arg0: i32) -> (i32, i32) {
    %c0_i32 = arith.constant 0 : i32
    %c0_i32_0 = arith.constant 0 : i32
    %c0_i32_1 = arith.constant 0 : i32
    return %c0_i32, %c0_i32_0 : i32, i32
  }
  func.func @transform_7(%arg0: i32) -> (i32, i32) {
    %c0_i32 = arith.constant 0 : i32
    %c0_i32_0 = arith.constant 0 : i32
    %c0_i32_1 = arith.constant 0 : i32
    return %c0_i32, %c0_i32_0 : i32, i32
  }
}

</mosaic_0001>

<llo_original>
// kernel: simclr_forward.1
$region0: #{simclr_forward.1}
  #allocation0 [shape = 'u32[]', space=smem, size = 0x4, offset = 0x4, fixed_abs, tag = 'smem constant byte address 0x4 - core index']
  #allocation1 [shape = 'u32[144,128]{1,0:T(1,128)}', space=vmem, size = 0x12000, scoped, tag = 'internal scratch']
  %s0 = inlined_call_operand.vmem [shape: bf16[512,128], index: 0, kind: input, shape index: {}]
  %s1 = inlined_call_operand.vmem [shape: bf16[128,64], index: 1, kind: input, shape index: {}]
  %s2 = inlined_call_operand.vmem [shape: f32[1,64], index: 2, kind: input, shape index: {}]
  %s3 = inlined_call_operand.vmem [shape: bf16[64,2048], index: 3, kind: input, shape index: {}]
  %s4 = inlined_call_operand.vmem [shape: f32[1,2048], index: 4, kind: input, shape index: {}]
  %s5 = inlined_call_operand.vmem [shape: bf16[2048,128], index: 5, kind: input, shape index: {}]
  %s6 = inlined_call_operand.vmem [shape: f32[1,128], index: 6, kind: input, shape index: {}]
  %s7 = inlined_call_operand.hbm [shape: f32[2,128], index: 7, kind: output, shape index: {}]
  %s8 = sld [smem:[#allocation0]]
  $region38: #{simclr_forward.1} parent=0
    _
  %s10 = ssub.s32 1, %s8
  %s11 = scalar_select 0, %s10, %s8
  $region1: #{simclr_forward.1} parent=0
    #allocation2 [shape = 'u8[1024]{0}', space=vmem, size = 0x400, scoped, tag = 'output window, operand 0, single buffered']
    #allocation3 [shape = 's32[1]{0}', space=sflag, size = 0x4, scoped, tag = 'scoped memory for simclr_forward.1']
    %12 = vsyncpa [#allocation3], 0
    // Predicated region
    $region2: #{simclr_forward.1} parent=1 // pred_check
      _
    $region3: #{simclr_forward.1} parent=1 // pred_check_branch
      %14 = sbr.rel (0) target = $region5
    $region4: #{simclr_forward.1} parent=1 // pred_region
      _
    $region5: #{simclr_forward.1} parent=1 // pred_fallthru
      _
    // Predicated region
    $region6: #{simclr_forward.1} parent=1 // pred_check
      _
    $region7: #{simclr_forward.1} parent=1 // pred_check_branch
      %16 = sbr.rel (0) target = $region9
    $region8: #{simclr_forward.1} parent=1 // pred_region
      _
    $region9: #{simclr_forward.1} parent=1 // pred_fallthru
      _
    // Predicated region
    $region10: #{simclr_forward.1} parent=1 // pred_check
      _
    $region11: #{simclr_forward.1} parent=1 // pred_check_branch
      %18 = sbr.rel (0) target = $region13
    $region12: #{simclr_forward.1} parent=1 // pred_region
      _
    $region13: #{simclr_forward.1} parent=1 // pred_fallthru
      _
    // Predicated region
    $region14: #{simclr_forward.1} parent=1 // pred_check
      _
    $region15: #{simclr_forward.1} parent=1 // pred_check_branch
      %20 = sbr.rel (0) target = $region17
    $region16: #{simclr_forward.1} parent=1 // pred_region
      _
    $region17: #{simclr_forward.1} parent=1 // pred_fallthru
      _
    // Predicated region
    $region18: #{simclr_forward.1} parent=1 // pred_check
      _
    $region19: #{simclr_forward.1} parent=1 // pred_check_branch
      %22 = sbr.rel (0) target = $region21
    $region20: #{simclr_forward.1} parent=1 // pred_region
      _
    $region21: #{simclr_forward.1} parent=1 // pred_fallthru
      _
    // Predicated region
    $region22: #{simclr_forward.1} parent=1 // pred_check
      _
    $region23: #{simclr_forward.1} parent=1 // pred_check_branch
      %24 = sbr.rel (0) target = $region25
    $region24: #{simclr_forward.1} parent=1 // pred_region
      _
    $region25: #{simclr_forward.1} parent=1 // pred_fallthru
      _
    // Predicated region
    $region26: #{simclr_forward.1} parent=1 // pred_check
      _
    $region27: #{simclr_forward.1} parent=1 // pred_check_branch
      %26 = sbr.rel (0) target = $region29
    $region28: #{simclr_forward.1} parent=1 // pred_region
      _
    $region29: #{simclr_forward.1} parent=1 // pred_fallthru
      _
    %v28 = vld [vmem:[%s0] sm:$0xf]
    %v29 = vld [vmem:[%s0 + $0x4] sm:$0xf]
    %v30 = vld [vmem:[%s0 + $0x8] sm:$0xf]
    %v31 = vld [vmem:[%s0 + $0xc] sm:$0xf]
    %v32 = vld [vmem:[%s0 + $0x10] sm:$0xf]
    %v33 = vld [vmem:[%s0 + $0x14] sm:$0xf]
    %v34 = vld [vmem:[%s0 + $0x18] sm:$0xf]
    %v35 = vld [vmem:[%s0 + $0x1c] sm:$0xf]
    %v36 = vld [vmem:[%s0 + $0x20] sm:$0xf]
    %v37 = vld [vmem:[%s0 + $0x24] sm:$0xf]
    %v38 = vld [vmem:[%s0 + $0x28] sm:$0xf]
    %v39 = vld [vmem:[%s0 + $0x2c] sm:$0xf]
    %v40 = vld [vmem:[%s0 + $0x30] sm:$0xf]
    %v41 = vld [vmem:[%s0 + $0x34] sm:$0xf]
    %v42 = vld [vmem:[%s0 + $0x38] sm:$0xf]
    %v43 = vld [vmem:[%s0 + $0x3c] sm:$0xf]
    %v44 = vld [vmem:[%s0 + $0x40] sm:$0xf]
    %v45 = vld [vmem:[%s0 + $0x44] sm:$0xf]
    %v46 = vld [vmem:[%s0 + $0x48] sm:$0xf]
    %v47 = vld [vmem:[%s0 + $0x4c] sm:$0xf]
    %v48 = vld [vmem:[%s0 + $0x50] sm:$0xf]
    %v49 = vld [vmem:[%s0 + $0x54] sm:$0xf]
    %v50 = vld [vmem:[%s0 + $0x58] sm:$0xf]
    %v51 = vld [vmem:[%s0 + $0x5c] sm:$0xf]
    %v52 = vld [vmem:[%s0 + $0x60] sm:$0xf]
    %v53 = vld [vmem:[%s0 + $0x64] sm:$0xf]
    %v54 = vld [vmem:[%s0 + $0x68] sm:$0xf]
    %v55 = vld [vmem:[%s0 + $0x6c] sm:$0xf]
    %v56 = vld [vmem:[%s0 + $0x70] sm:$0xf]
    %v57 = vld [vmem:[%s0 + $0x74] sm:$0xf]
    %v58 = vld [vmem:[%s0 + $0x78] sm:$0xf]
    %v59 = vld [vmem:[%s0 + $0x7c] sm:$0xf]
    %v60 = vld [vmem:[%s0 + $0x80] sm:$0xf]
    %v61 = vld [vmem:[%s0 + $0x84] sm:$0xf]
    %v62 = vld [vmem:[%s0 + $0x88] sm:$0xf]
    %v63 = vld [vmem:[%s0 + $0x8c] sm:$0xf]
    %v64 = vld [vmem:[%s0 + $0x90] sm:$0xf]
    %v65 = vld [vmem:[%s0 + $0x94] sm:$0xf]
    %v66 = vld [vmem:[%s0 + $0x98] sm:$0xf]
    %v67 = vld [vmem:[%s0 + $0x9c] sm:$0xf]
    %v68 = vld [vmem:[%s0 + $0xa0] sm:$0xf]
    %v69 = vld [vmem:[%s0 + $0xa4] sm:$0xf]
    %v70 = vld [vmem:[%s0 + $0xa8] sm:$0xf]
    %v71 = vld [vmem:[%s0 + $0xac] sm:$0xf]
    %v72 = vld [vmem:[%s0 + $0xb0] sm:$0xf]
    %v73 = vld [vmem:[%s0 + $0xb4] sm:$0xf]
    %v74 = vld [vmem:[%s0 + $0xb8] sm:$0xf]
    %v75 = vld [vmem:[%s0 + $0xbc] sm:$0xf]
    %v76 = vld [vmem:[%s0 + $0xc0] sm:$0xf]
    %v77 = vld [vmem:[%s0 + $0xc4] sm:$0xf]
    %v78 = vld [vmem:[%s0 + $0xc8] sm:$0xf]
    %v79 = vld [vmem:[%s0 + $0xcc] sm:$0xf]
    %v80 = vld [vmem:[%s0 + $0xd0] sm:$0xf]
    %v81 = vld [vmem:[%s0 + $0xd4] sm:$0xf]
    %v82 = vld [vmem:[%s0 + $0xd8] sm:$0xf]
    %v83 = vld [vmem:[%s0 + $0xdc] sm:$0xf]
    %v84 = vld [vmem:[%s0 + $0xe0] sm:$0xf]
    %v85 = vld [vmem:[%s0 + $0xe4] sm:$0xf]
    %v86 = vld [vmem:[%s0 + $0xe8] sm:$0xf]
    %v87 = vld [vmem:[%s0 + $0xec] sm:$0xf]
    %v88 = vld [vmem:[%s0 + $0xf0] sm:$0xf]
    %v89 = vld [vmem:[%s0 + $0xf4] sm:$0xf]
    %v90 = vld [vmem:[%s0 + $0xf8] sm:$0xf]
    %v91 = vld [vmem:[%s0 + $0xfc] sm:$0xf]
    %v92 = vld [vmem:[%s1] sm:$0xf]
    %v93 = vld [vmem:[%s1 + $0x4] sm:$0xf]
    %v94 = vld [vmem:[%s1 + $0x8] sm:$0xf]
    %v95 = vld [vmem:[%s1 + $0xc] sm:$0xf]
    %v96 = vld [vmem:[%s1 + $0x10] sm:$0xf]
    %v97 = vld [vmem:[%s1 + $0x14] sm:$0xf]
    %v98 = vld [vmem:[%s1 + $0x18] sm:$0xf]
    %v99 = vld [vmem:[%s1 + $0x1c] sm:$0xf]
    %v100 = vld [vmem:[%s1 + $0x20] sm:$0xf]
    %v101 = vld [vmem:[%s1 + $0x24] sm:$0xf]
    %v102 = vld [vmem:[%s1 + $0x28] sm:$0xf]
    %v103 = vld [vmem:[%s1 + $0x2c] sm:$0xf]
    %v104 = vld [vmem:[%s1 + $0x30] sm:$0xf]
    %v105 = vld [vmem:[%s1 + $0x34] sm:$0xf]
    %v106 = vld [vmem:[%s1 + $0x38] sm:$0xf]
    %v107 = vld [vmem:[%s1 + $0x3c] sm:$0xf]
    %v108 = vld [vmem:[%s2] sm:$0x1]
    %v110 = vlaneseq
    %v111 = vshrl.u32 %v110, 7
    %v112 = vsub.s32 0, %v111
    %v113 = vrot.slane %v108, %v112
    %v179 = vunpack.c.l.b16 %v28
    %v180 = vunpack.c.l.b16 %v29
    %v181 = vunpack.c.l.b16 %v30
    %v182 = vunpack.c.l.b16 %v31
    %v183 = vunpack.c.l.b16 %v32
    %v184 = vunpack.c.l.b16 %v33
    %v185 = vunpack.c.l.b16 %v34
    %v186 = vunpack.c.l.b16 %v35
    %v187 = vunpack.c.l.b16 %v36
    %v188 = vunpack.c.l.b16 %v37
    %v189 = vunpack.c.l.b16 %v38
    %v190 = vunpack.c.l.b16 %v39
    %v191 = vunpack.c.l.b16 %v40
    %v192 = vunpack.c.l.b16 %v41
    %v193 = vunpack.c.l.b16 %v42
    %v194 = vunpack.c.l.b16 %v43
    %v195 = vunpack.c.l.b16 %v44
    %v196 = vunpack.c.l.b16 %v45
    %v197 = vunpack.c.l.b16 %v46
    %v198 = vunpack.c.l.b16 %v47
    %v199 = vunpack.c.l.b16 %v48
    %v200 = vunpack.c.l.b16 %v49
    %v201 = vunpack.c.l.b16 %v50
    %v202 = vunpack.c.l.b16 %v51
    %v203 = vunpack.c.l.b16 %v52
    %v204 = vunpack.c.l.b16 %v53
    %v205 = vunpack.c.l.b16 %v54
    %v206 = vunpack.c.l.b16 %v55
    %v207 = vunpack.c.l.b16 %v56
    %v208 = vunpack.c.l.b16 %v57
    %v209 = vunpack.c.l.b16 %v58
    %v210 = vunpack.c.l.b16 %v59
    %v211 = vunpack.c.l.b16 %v60
    %v212 = vunpack.c.l.b16 %v61
    %v213 = vunpack.c.l.b16 %v62
    %v214 = vunpack.c.l.b16 %v63
    %v215 = vunpack.c.l.b16 %v64
    %v216 = vunpack.c.l.b16 %v65
    %v217 = vunpack.c.l.b16 %v66
    %v218 = vunpack.c.l.b16 %v67
    %v219 = vunpack.c.l.b16 %v68
    %v220 = vunpack.c.l.b16 %v69
    %v221 = vunpack.c.l.b16 %v70
    %v222 = vunpack.c.l.b16 %v71
    %v223 = vunpack.c.l.b16 %v72
    %v224 = vunpack.c.l.b16 %v73
    %v225 = vunpack.c.l.b16 %v74
    %v226 = vunpack.c.l.b16 %v75
    %v227 = vunpack.c.l.b16 %v76
    %v228 = vunpack.c.l.b16 %v77
    %v229 = vunpack.c.l.b16 %v78
    %v230 = vunpack.c.l.b16 %v79
    %v231 = vunpack.c.l.b16 %v80
    %v232 = vunpack.c.l.b16 %v81
    %v233 = vunpack.c.l.b16 %v82
    %v234 = vunpack.c.l.b16 %v83
    %v235 = vunpack.c.l.b16 %v84
    %v236 = vunpack.c.l.b16 %v85
    %v237 = vunpack.c.l.b16 %v86
    %v238 = vunpack.c.l.b16 %v87
    %v239 = vunpack.c.l.b16 %v88
    %v240 = vunpack.c.l.b16 %v89
    %v241 = vunpack.c.l.b16 %v90
    %v242 = vunpack.c.l.b16 %v91
    %v243 = vpack.c.b16 %v180, %v179
    %v244 = vpack.c.b16 %v182, %v181
    %v245 = vpack.c.b16 %v184, %v183
    %v246 = vpack.c.b16 %v186, %v185
    %v247 = vpack.c.b16 %v188, %v187
    %v248 = vpack.c.b16 %v190, %v189
    %v249 = vpack.c.b16 %v192, %v191
    %v250 = vpack.c.b16 %v194, %v193
    %v251 = vpack.c.b16 %v196, %v195
    %v252 = vpack.c.b16 %v198, %v197
    %v253 = vpack.c.b16 %v200, %v199
    %v254 = vpack.c.b16 %v202, %v201
    %v255 = vpack.c.b16 %v204, %v203
    %v256 = vpack.c.b16 %v206, %v205
    %v257 = vpack.c.b16 %v208, %v207
    %v258 = vpack.c.b16 %v210, %v209
    %v259 = vpack.c.b16 %v212, %v211
    %v260 = vpack.c.b16 %v214, %v213
    %v261 = vpack.c.b16 %v216, %v215
    %v262 = vpack.c.b16 %v218, %v217
    %v263 = vpack.c.b16 %v220, %v219
    %v264 = vpack.c.b16 %v222, %v221
    %v265 = vpack.c.b16 %v224, %v223
    %v266 = vpack.c.b16 %v226, %v225
    %v267 = vpack.c.b16 %v228, %v227
    %v268 = vpack.c.b16 %v230, %v229
    %v269 = vpack.c.b16 %v232, %v231
    %v270 = vpack.c.b16 %v234, %v233
    %v271 = vpack.c.b16 %v236, %v235
    %v272 = vpack.c.b16 %v238, %v237
    %v273 = vpack.c.b16 %v240, %v239
    %v274 = vpack.c.b16 %v242, %v241
    %v323 = vunpack.c.l.b16 %v92
    %v324 = vunpack.c.l.b16 %v93
    %v325 = vunpack.c.l.b16 %v94
    %v326 = vunpack.c.l.b16 %v95
    %v327 = vunpack.c.l.b16 %v96
    %v328 = vunpack.c.l.b16 %v97
    %v329 = vunpack.c.l.b16 %v98
    %v330 = vunpack.c.l.b16 %v99
    %v331 = vunpack.c.l.b16 %v100
    %v332 = vunpack.c.l.b16 %v101
    %v333 = vunpack.c.l.b16 %v102
    %v334 = vunpack.c.l.b16 %v103
    %v335 = vunpack.c.l.b16 %v104
    %v336 = vunpack.c.l.b16 %v105
    %v337 = vunpack.c.l.b16 %v106
    %v338 = vunpack.c.l.b16 %v107
    %v339 = vpack.c.b16 %v324, %v323
    %v340 = vpack.c.b16 %v326, %v325
    %v341 = vpack.c.b16 %v328, %v327
    %v342 = vpack.c.b16 %v330, %v329
    %v343 = vpack.c.b16 %v332, %v331
    %v344 = vpack.c.b16 %v334, %v333
    %v345 = vpack.c.b16 %v336, %v335
    %v346 = vpack.c.b16 %v338, %v337
    %355 = vmatprep.subr.bf16.mxu0 0
    %356 = vmatpush1.bf16.msra.mxu0 %v339
    %357 = vmatprep.subr.bf16.mxu0 0
    %358 = vmatpush1.bf16.msra.mxu0 %v340
    %359 = vmatprep.subr.bf16.mxu0 0
    %360 = vmatpush1.bf16.msra.mxu0 %v341
    %361 = vmatprep.subr.bf16.mxu0 0
    %362 = vmatpush1.bf16.msra.mxu0 %v342
    %363 = vmatprep.subr.bf16.mxu0 0
    %364 = vmatpush1.bf16.msra.mxu0 %v343
    %365 = vmatprep.subr.bf16.mxu0 0
    %366 = vmatpush1.bf16.msra.mxu0 %v344
    %367 = vmatprep.subr.bf16.mxu0 0
    %368 = vmatpush1.bf16.msra.mxu0 %v345
    %369 = vmatprep.subr.bf16.mxu0 0
    %370 = vmatpush1.bf16.msra.mxu0 %v346
    %371 = vmatprep.subr.bf16.mxu0 0
    %372 = vmatpush1.bf16.msra.mxu0 0
    %373 = vmatprep.subr.bf16.mxu0 0
    %374 = vmatpush1.bf16.msra.mxu0 0
    %375 = vmatprep.subr.bf16.mxu0 0
    %376 = vmatpush1.bf16.msra.mxu0 0
    %377 = vmatprep.subr.bf16.mxu0 0
    %378 = vmatpush1.bf16.msra.mxu0 0
    %379 = vmatprep.subr.bf16.mxu0 0
    %380 = vmatpush1.bf16.msra.mxu0 0
    %381 = vmatprep.subr.bf16.mxu0 0
    %382 = vmatpush1.bf16.msra.mxu0 0
    %383 = vmatprep.subr.bf16.mxu0 0
    %384 = vmatpush1.bf16.msra.mxu0 0
    %385 = vmatprep.subr.bf16.mxu0 0
    %386 = vmatpush1.bf16.msra.mxu0 0
    %387 = vmatprep.mubr.bf16.mxu0 0
    %388 = vmatmul.mubr.bf16.gmra.mrb[0].mxu0 %v243
    %v389 = vpop.f32.mrb[0].mxu0
    %v390 = vadd.f32 %v113, %v389
    %v391 = vpop.f32.mrb[0].mxu0
    %v392 = vpop.f32.mrb[0].mxu0
    %v393 = vadd.f32 %v113, %v392
    %v394 = vpop.f32.mrb[0].mxu0
    %395 = vmatprep.mubr.bf16.mxu0 0
    %396 = vmatmul.mubr.bf16.gmra.mrb[0].mxu0 %v244
    %v397 = vpop.f32.mrb[0].mxu0
    %v398 = vadd.f32 %v113, %v397
    %v399 = vpop.f32.mrb[0].mxu0
    %v400 = vpop.f32.mrb[0].mxu0
    %v401 = vadd.f32 %v113, %v400
    %v402 = vpop.f32.mrb[0].mxu0
    %403 = vmatprep.mubr.bf16.mxu0 0
    %404 = vmatmul.mubr.bf16.gmra.mrb[0].mxu0 %v245
    %v405 = vpop.f32.mrb[0].mxu0
    %v406 = vadd.f32 %v113, %v405
    %v407 = vpop.f32.mrb[0].mxu0
    %v408 = vpop.f32.mrb[0].mxu0
    %v409 = vadd.f32 %v113, %v408
    %v410 = vpop.f32.mrb[0].mxu0
    %411 = vmatprep.mubr.bf16.mxu0 0
    %412 = vmatmul.mubr.bf16.gmra.mrb[0].mxu0 %v246
    %v413 = vpop.f32.mrb[0].mxu0
    %v414 = vadd.f32 %v113, %v413
    %v415 = vpop.f32.mrb[0].mxu0
    %v416 = vpop.f32.mrb[0].mxu0
    %v417 = vadd.f32 %v113, %v416
    %v418 = vpop.f32.mrb[0].mxu0
    %419 = vmatprep.mubr.bf16.mxu0 0
    %420 = vmatmul.mubr.bf16.gmra.mrb[0].mxu0 %v247
    %v421 = vpop.f32.mrb[0].mxu0
    %v422 = vadd.f32 %v113, %v421
    %v423 = vpop.f32.mrb[0].mxu0
    %v424 = vpop.f32.mrb[0].mxu0
    %v425 = vadd.f32 %v113, %v424
    %v426 = vpop.f32.mrb[0].mxu0
    %427 = vmatprep.mubr.bf16.mxu0 0
    %428 = vmatmul.mubr.bf16.gmra.mrb[0].mxu0 %v248
    %v429 = vpop.f32.mrb[0].mxu0
    %v430 = vadd.f32 %v113, %v429
    %v431 = vpop.f32.mrb[0].mxu0
    %v432 = vpop.f32.mrb[0].mxu0
    %v433 = vadd.f32 %v113, %v432
    %v434 = vpop.f32.mrb[0].mxu0
    %435 = vmatprep.mubr.bf16.mxu0 0
    %436 = vmatmul.mubr.bf16.gmra.mrb[0].mxu0 %v249
    %v437 = vpop.f32.mrb[0].mxu0
    %v438 = vadd.f32 %v113, %v437
    %v439 = vpop.f32.mrb[0].mxu0
    %v440 = vpop.f32.mrb[0].mxu0
    %v441 = vadd.f32 %v113, %v440
    %v442 = vpop.f32.mrb[0].mxu0
    %443 = vmatprep.mubr.bf16.mxu0 0
    %444 = vmatmul.mubr.bf16.gmra.mrb[0].mxu0 %v250
    %v445 = vpop.f32.mrb[0].mxu0
    %v446 = vadd.f32 %v113, %v445
    %v447 = vpop.f32.mrb[0].mxu0
    %v448 = vpop.f32.mrb[0].mxu0
    %v449 = vadd.f32 %v113, %v448
    %v450 = vpop.f32.mrb[0].mxu0
    %451 = vmatprep.mubr.bf16.mxu0 0
    %452 = vmatmul.mubr.bf16.gmra.mrb[0].mxu0 %v251
    %v453 = vpop.f32.mrb[0].mxu0
    %v454 = vadd.f32 %v113, %v453
    %v455 = vpop.f32.mrb[0].mxu0
    %v456 = vpop.f32.mrb[0].mxu0
    %v457 = vadd.f32 %v113, %v456
    %v458 = vpop.f32.mrb[0].mxu0
    %459 = vmatprep.mubr.bf16.mxu0 0
    %460 = vmatmul.mubr.bf16.gmra.mrb[0].mxu0 %v252
    %v461 = vpop.f32.mrb[0].mxu0
    %v462 = vadd.f32 %v113, %v461
    %v463 = vpop.f32.mrb[0].mxu0
    %v464 = vpop.f32.mrb[0].mxu0
    %v465 = vadd.f32 %v113, %v464
    %v466 = vpop.f32.mrb[0].mxu0
    %467 = vmatprep.mubr.bf16.mxu0 0
    %468 = vmatmul.mubr.bf16.gmra.mrb[0].mxu0 %v253
    %v469 = vpop.f32.mrb[0].mxu0
    %v470 = vadd.f32 %v113, %v469
    %v471 = vpop.f32.mrb[0].mxu0
    %v472 = vpop.f32.mrb[0].mxu0
    %v473 = vadd.f32 %v113, %v472
    %v474 = vpop.f32.mrb[0].mxu0
    %475 = vmatprep.mubr.bf16.mxu0 0
    %476 = vmatmul.mubr.bf16.gmra.mrb[0].mxu0 %v254
    %v477 = vpop.f32.mrb[0].mxu0
    %v478 = vadd.f32 %v113, %v477
    %v479 = vpop.f32.mrb[0].mxu0
    %v480 = vpop.f32.mrb[0].mxu0
    %v481 = vadd.f32 %v113, %v480
    %v482 = vpop.f32.mrb[0].mxu0
    %483 = vmatprep.mubr.bf16.mxu0 0
    %484 = vmatmul.mubr.bf16.gmra.mrb[0].mxu0 %v255
    %v485 = vpop.f32.mrb[0].mxu0
    %v486 = vadd.f32 %v113, %v485
    %v487 = vpop.f32.mrb[0].mxu0
    %v488 = vpop.f32.mrb[0].mxu0
    %v489 = vadd.f32 %v113, %v488
    %v490 = vpop.f32.mrb[0].mxu0
    %491 = vmatprep.mubr.bf16.mxu0 0
    %492 = vmatmul.mubr.bf16.gmra.mrb[0].mxu0 %v256
    %v493 = vpop.f32.mrb[0].mxu0
    %v494 = vadd.f32 %v113, %v493
    %v495 = vpop.f32.mrb[0].mxu0
    %v496 = vpop.f32.mrb[0].mxu0
    %v497 = vadd.f32 %v113, %v496
    %v498 = vpop.f32.mrb[0].mxu0
    %499 = vmatprep.mubr.bf16.mxu0 0
    %500 = vmatmul.mubr.bf16.gmra.mrb[0].mxu0 %v257
    %v501 = vpop.f32.mrb[0].mxu0
    %v502 = vadd.f32 %v113, %v501
    %v503 = vpop.f32.mrb[0].mxu0
    %v504 = vpop.f32.mrb[0].mxu0
    %v505 = vadd.f32 %v113, %v504
    %v506 = vpop.f32.mrb[0].mxu0
    %507 = vmatprep.mubr.bf16.mxu0 0
    %508 = vmatmul.mubr.bf16.gmra.mrb[0].mxu0 %v258
    %v509 = vpop.f32.mrb[0].mxu0
    %v510 = vadd.f32 %v113, %v509
    %v511 = vpop.f32.mrb[0].mxu0
    %v512 = vpop.f32.mrb[0].mxu0
    %v513 = vadd.f32 %v113, %v512
    %v514 = vpop.f32.mrb[0].mxu0
    %515 = vmatprep.mubr.bf16.mxu0 0
    %516 = vmatmul.mubr.bf16.gmra.mrb[0].mxu0 %v259
    %v517 = vpop.f32.mrb[0].mxu0
    %v518 = vadd.f32 %v113, %v517
    %v519 = vpop.f32.mrb[0].mxu0
    %v520 = vpop.f32.mrb[0].mxu0
    %v521 = vadd.f32 %v113, %v520
    %v522 = vpop.f32.mrb[0].mxu0
    %523 = vmatprep.mubr.bf16.mxu0 0
    %524 = vmatmul.mubr.bf16.gmra.mrb[0].mxu0 %v260
    %v525 = vpop.f32.mrb[0].mxu0
    %v526 = vadd.f32 %v113, %v525
    %v527 = vpop.f32.mrb[0].mxu0
    %v528 = vpop.f32.mrb[0].mxu0
    %v529 = vadd.f32 %v113, %v528
    %v530 = vpop.f32.mrb[0].mxu0
    %531 = vmatprep.mubr.bf16.mxu0 0
    %532 = vmatmul.mubr.bf16.gmra.mrb[0].mxu0 %v261
    %v533 = vpop.f32.mrb[0].mxu0
    %v534 = vadd.f32 %v113, %v533
    %v535 = vpop.f32.mrb[0].mxu0
    %v536 = vpop.f32.mrb[0].mxu0
    %v537 = vadd.f32 %v113, %v536
    %v538 = vpop.f32.mrb[0].mxu0
    %539 = vmatprep.mubr.bf16.mxu0 0
    %540 = vmatmul.mubr.bf16.gmra.mrb[0].mxu0 %v262
    %v541 = vpop.f32.mrb[0].mxu0
    %v542 = vadd.f32 %v113, %v541
    %v543 = vpop.f32.mrb[0].mxu0
    %v544 = vpop.f32.mrb[0].mxu0
    %v545 = vadd.f32 %v113, %v544
    %v546 = vpop.f32.mrb[0].mxu0
    %547 = vmatprep.mubr.bf16.mxu0 0
    %548 = vmatmul.mubr.bf16.gmra.mrb[0].mxu0 %v263
    %v549 = vpop.f32.mrb[0].mxu0
    %v550 = vadd.f32 %v113, %v549
    %v551 = vpop.f32.mrb[0].mxu0
    %v552 = vpop.f32.mrb[0].mxu0
    %v553 = vadd.f32 %v113, %v552
    %v554 = vpop.f32.mrb[0].mxu0
    %555 = vmatprep.mubr.bf16.mxu0 0
    %556 = vmatmul.mubr.bf16.gmra.mrb[0].mxu0 %v264
    %v557 = vpop.f32.mrb[0].mxu0
    %v558 = vadd.f32 %v113, %v557
    %v559 = vpop.f32.mrb[0].mxu0
    %v560 = vpop.f32.mrb[0].mxu0
    %v561 = vadd.f32 %v113, %v560
    %v562 = vpop.f32.mrb[0].mxu0
    %563 = vmatprep.mubr.bf16.mxu0 0
    %564 = vmatmul.mubr.bf16.gmra.mrb[0].mxu0 %v265
    %v565 = vpop.f32.mrb[0].mxu0
    %v566 = vadd.f32 %v113, %v565
    %v567 = vpop.f32.mrb[0].mxu0
    %v568 = vpop.f32.mrb[0].mxu0
    %v569 = vadd.f32 %v113, %v568
    %v570 = vpop.f32.mrb[0].mxu0
    %571 = vmatprep.mubr.bf16.mxu0 0
    %572 = vmatmul.mubr.bf16.gmra.mrb[0].mxu0 %v266
    %v573 = vpop.f32.mrb[0].mxu0
    %v574 = vadd.f32 %v113, %v573
    %v575 = vpop.f32.mrb[0].mxu0
    %v576 = vpop.f32.mrb[0].mxu0
    %v577 = vadd.f32 %v113, %v576
    %v578 = vpop.f32.mrb[0].mxu0
    %579 = vmatprep.mubr.bf16.mxu0 0
    %580 = vmatmul.mubr.bf16.gmra.mrb[0].mxu0 %v267
    %v581 = vpop.f32.mrb[0].mxu0
    %v582 = vadd.f32 %v113, %v581
    %v583 = vpop.f32.mrb[0].mxu0
    %v584 = vpop.f32.mrb[0].mxu0
    %v585 = vadd.f32 %v113, %v584
    %v586 = vpop.f32.mrb[0].mxu0
    %587 = vmatprep.mubr.bf16.mxu0 0
    %588 = vmatmul.mubr.bf16.gmra.mrb[0].mxu0 %v268
    %v589 = vpop.f32.mrb[0].mxu0
    %v590 = vadd.f32 %v113, %v589
    %v591 = vpop.f32.mrb[0].mxu0
    %v592 = vpop.f32.mrb[0].mxu0
    %v593 = vadd.f32 %v113, %v592
    %v594 = vpop.f32.mrb[0].mxu0
    %595 = vmatprep.mubr.bf16.mxu0 0
    %596 = vmatmul.mubr.bf16.gmra.mrb[0].mxu0 %v269
    %v597 = vpop.f32.mrb[0].mxu0
    %v598 = vadd.f32 %v113, %v597
    %v599 = vpop.f32.mrb[0].mxu0
    %v600 = vpop.f32.mrb[0].mxu0
    %v601 = vadd.f32 %v113, %v600
    %v602 = vpop.f32.mrb[0].mxu0
    %603 = vmatprep.mubr.bf16.mxu0 0
    %604 = vmatmul.mubr.bf16.gmra.mrb[0].mxu0 %v270
    %v605 = vpop.f32.mrb[0].mxu0
    %v606 = vadd.f32 %v113, %v605
    %v607 = vpop.f32.mrb[0].mxu0
    %v608 = vpop.f32.mrb[0].mxu0
    %v609 = vadd.f32 %v113, %v608
    %v610 = vpop.f32.mrb[0].mxu0
    %611 = vmatprep.mubr.bf16.mxu0 0
    %612 = vmatmul.mubr.bf16.gmra.mrb[0].mxu0 %v271
    %v613 = vpop.f32.mrb[0].mxu0
    %v614 = vadd.f32 %v113, %v613
    %v615 = vpop.f32.mrb[0].mxu0
    %v616 = vpop.f32.mrb[0].mxu0
    %v617 = vadd.f32 %v113, %v616
    %v618 = vpop.f32.mrb[0].mxu0
    %619 = vmatprep.mubr.bf16.mxu0 0
    %620 = vmatmul.mubr.bf16.gmra.mrb[0].mxu0 %v272
    %v621 = vpop.f32.mrb[0].mxu0
    %v622 = vadd.f32 %v113, %v621
    %v623 = vpop.f32.mrb[0].mxu0
    %v624 = vpop.f32.mrb[0].mxu0
    %v625 = vadd.f32 %v113, %v624
    %v626 = vpop.f32.mrb[0].mxu0
    %627 = vmatprep.mubr.bf16.mxu0 0
    %628 = vmatmul.mubr.bf16.gmra.mrb[0].mxu0 %v273
    %v629 = vpop.f32.mrb[0].mxu0
    %v630 = vadd.f32 %v113, %v629
    %v631 = vpop.f32.mrb[0].mxu0
    %v632 = vpop.f32.mrb[0].mxu0
    %v633 = vadd.f32 %v113, %v632
    %v634 = vpop.f32.mrb[0].mxu0
    %635 = vmatprep.mubr.bf16.mxu0 0
    %636 = vmatmul.mubr.bf16.gmra.mrb[0].mxu0 %v274
    %v637 = vpop.f32.mrb[0].mxu0
    %v638 = vadd.f32 %v113, %v637
    %v639 = vpop.f32.mrb[0].mxu0
    %v640 = vpop.f32.mrb[0].mxu0
    %v641 = vadd.f32 %v113, %v640
    %v642 = vpop.f32.mrb[0].mxu0
    %643 = vdwg.mxu0
    %v644 = vmax.f32 %v390, 0.0
    %v645 = vmax.f32 %v393, 0.0
    %v646 = vmax.f32 %v398, 0.0
    %v647 = vmax.f32 %v401, 0.0
    %v648 = vmax.f32 %v406, 0.0
    %v649 = vmax.f32 %v409, 0.0
    %v650 = vmax.f32 %v414, 0.0
    %v651 = vmax.f32 %v417, 0.0
    %v652 = vmax.f32 %v422, 0.0
    %v653 = vmax.f32 %v425, 0.0
    %v654 = vmax.f32 %v430, 0.0
    %v655 = vmax.f32 %v433, 0.0
    %v656 = vmax.f32 %v438, 0.0
    %v657 = vmax.f32 %v441, 0.0
    %v658 = vmax.f32 %v446, 0.0
    %v659 = vmax.f32 %v449, 0.0
    %v660 = vmax.f32 %v454, 0.0
    %v661 = vmax.f32 %v457, 0.0
    %v662 = vmax.f32 %v462, 0.0
    %v663 = vmax.f32 %v465, 0.0
    %v664 = vmax.f32 %v470, 0.0
    %v665 = vmax.f32 %v473, 0.0
    %v666 = vmax.f32 %v478, 0.0
    %v667 = vmax.f32 %v481, 0.0
    %v668 = vmax.f32 %v486, 0.0
    %v669 = vmax.f32 %v489, 0.0
    %v670 = vmax.f32 %v494, 0.0
    %v671 = vmax.f32 %v497, 0.0
    %v672 = vmax.f32 %v502, 0.0
    %v673 = vmax.f32 %v505, 0.0
    %v674 = vmax.f32 %v510, 0.0
    %v675 = vmax.f32 %v513, 0.0
    %v676 = vmax.f32 %v518, 0.0
    %v677 = vmax.f32 %v521, 0.0
    %v678 = vmax.f32 %v526, 0.0
    %v679 = vmax.f32 %v529, 0.0
    %v680 = vmax.f32 %v534, 0.0
    %v681 = vmax.f32 %v537, 0.0
    %v682 = vmax.f32 %v542, 0.0
    %v683 = vmax.f32 %v545, 0.0
    %v684 = vmax.f32 %v550, 0.0
    %v685 = vmax.f32 %v553, 0.0
    %v686 = vmax.f32 %v558, 0.0
    %v687 = vmax.f32 %v561, 0.0
    %v688 = vmax.f32 %v566, 0.0
    %v689 = vmax.f32 %v569, 0.0
    %v690 = vmax.f32 %v574, 0.0
    %v691 = vmax.f32 %v577, 0.0
    %v692 = vmax.f32 %v582, 0.0
    %v693 = vmax.f32 %v585, 0.0
    %v694 = vmax.f32 %v590, 0.0
    %v695 = vmax.f32 %v593, 0.0
    %v696 = vmax.f32 %v598, 0.0
    %v697 = vmax.f32 %v601, 0.0
    %v698 = vmax.f32 %v606, 0.0
    %v699 = vmax.f32 %v609, 0.0
    %v700 = vmax.f32 %v614, 0.0
    %v701 = vmax.f32 %v617, 0.0
    %v702 = vmax.f32 %v622, 0.0
    %v703 = vmax.f32 %v625, 0.0
    %v704 = vmax.f32 %v630, 0.0
    %v705 = vmax.f32 %v633, 0.0
    %v706 = vmax.f32 %v638, 0.0
    %v707 = vmax.f32 %v641, 0.0
    %vm708 = vcmask 523264
    %v709 = vsel %vm708, %v644, 0.0
    %v710 = vsel %vm708, %v645, 0.0
    %v711 = vadd.f32 %v709, %v710
    %v712 = vsel %vm708, %v646, 0.0
    %v713 = vadd.f32 %v711, %v712
    %v714 = vsel %vm708, %v647, 0.0
    %v715 = vadd.f32 %v713, %v714
    %v716 = vsel %vm708, %v648, 0.0
    %v717 = vadd.f32 %v715, %v716
    %v718 = vsel %vm708, %v649, 0.0
    %v719 = vadd.f32 %v717, %v718
    %v720 = vsel %vm708, %v650, 0.0
    %v721 = vadd.f32 %v719, %v720
    %v722 = vsel %vm708, %v651, 0.0
    %v723 = vadd.f32 %v721, %v722
    %v724 = vsel %vm708, %v652, 0.0
    %v725 = vadd.f32 %v723, %v724
    %v726 = vsel %vm708, %v653, 0.0
    %v727 = vadd.f32 %v725, %v726
    %v728 = vsel %vm708, %v654, 0.0
    %v729 = vadd.f32 %v727, %v728
    %v730 = vsel %vm708, %v655, 0.0
    %v731 = vadd.f32 %v729, %v730
    %v732 = vsel %vm708, %v656, 0.0
    %v733 = vadd.f32 %v731, %v732
    %v734 = vsel %vm708, %v657, 0.0
    %v735 = vadd.f32 %v733, %v734
    %v736 = vsel %vm708, %v658, 0.0
    %v737 = vadd.f32 %v735, %v736
    %v738 = vsel %vm708, %v659, 0.0
    %v739 = vadd.f32 %v737, %v738
    %v740 = vsel %vm708, %v660, 0.0
    %v741 = vadd.f32 %v739, %v740
    %v742 = vsel %vm708, %v661, 0.0
    %v743 = vadd.f32 %v741, %v742
    %v744 = vsel %vm708, %v662, 0.0
    %v745 = vadd.f32 %v743, %v744
    %v746 = vsel %vm708, %v663, 0.0
    %v747 = vadd.f32 %v745, %v746
    %v748 = vsel %vm708, %v664, 0.0
    %v749 = vadd.f32 %v747, %v748
    %v750 = vsel %vm708, %v665, 0.0
    %v751 = vadd.f32 %v749, %v750
    %v752 = vsel %vm708, %v666, 0.0
    %v753 = vadd.f32 %v751, %v752
    %v754 = vsel %vm708, %v667, 0.0
    %v755 = vadd.f32 %v753, %v754
    %v756 = vsel %vm708, %v668, 0.0
    %v757 = vadd.f32 %v755, %v756
    %v758 = vsel %vm708, %v669, 0.0
    %v759 = vadd.f32 %v757, %v758
    %v760 = vsel %vm708, %v670, 0.0
    %v761 = vadd.f32 %v759, %v760
    %v762 = vsel %vm708, %v671, 0.0
    %v763 = vadd.f32 %v761, %v762
    %v764 = vsel %vm708, %v672, 0.0
    %v765 = vadd.f32 %v763, %v764
    %v766 = vsel %vm708, %v673, 0.0
    %v767 = vadd.f32 %v765, %v766
    %v768 = vsel %vm708, %v674, 0.0
    %v769 = vadd.f32 %v767, %v768
    %v770 = vsel %vm708, %v675, 0.0
    %v771 = vadd.f32 %v769, %v770
    %v772 = vrot.slane %v771, 4
    %v773 = vadd.f32 %v771, %v772
    %v774 = vrot.slane %v773, 2
    %v775 = vadd.f32 %v773, %v774
    %v776 = vrot.slane %v775, 1
    %v777 = vadd.f32 %v775, %v776
    %v778 = vsel %vm708, %v676, 0.0
    %v779 = vsel %vm708, %v677, 0.0
    %v780 = vadd.f32 %v778, %v779
    %v781 = vsel %vm708, %v678, 0.0
    %v782 = vadd.f32 %v780, %v781
    %v783 = vsel %vm708, %v679, 0.0
    %v784 = vadd.f32 %v782, %v783
    %v785 = vsel %vm708, %v680, 0.0
    %v786 = vadd.f32 %v784, %v785
    %v787 = vsel %vm708, %v681, 0.0
    %v788 = vadd.f32 %v786, %v787
    %v789 = vsel %vm708, %v682, 0.0
    %v790 = vadd.f32 %v788, %v789
    %v791 = vsel %vm708, %v683, 0.0
    %v792 = vadd.f32 %v790, %v791
    %v793 = vsel %vm708, %v684, 0.0
    %v794 = vadd.f32 %v792, %v793
    %v795 = vsel %vm708, %v685, 0.0
    %v796 = vadd.f32 %v794, %v795
    %v797 = vsel %vm708, %v686, 0.0
    %v798 = vadd.f32 %v796, %v797
    %v799 = vsel %vm708, %v687, 0.0
    %v800 = vadd.f32 %v798, %v799
    %v801 = vsel %vm708, %v688, 0.0
    %v802 = vadd.f32 %v800, %v801
    %v803 = vsel %vm708, %v689, 0.0
    %v804 = vadd.f32 %v802, %v803
    %v805 = vsel %vm708, %v690, 0.0
    %v806 = vadd.f32 %v804, %v805
    %v807 = vsel %vm708, %v691, 0.0
    %v808 = vadd.f32 %v806, %v807
    %v809 = vsel %vm708, %v692, 0.0
    %v810 = vadd.f32 %v808, %v809
    %v811 = vsel %vm708, %v693, 0.0
    %v812 = vadd.f32 %v810, %v811
    %v813 = vsel %vm708, %v694, 0.0
    %v814 = vadd.f32 %v812, %v813
    %v815 = vsel %vm708, %v695, 0.0
    %v816 = vadd.f32 %v814, %v815
    %v817 = vsel %vm708, %v696, 0.0
    %v818 = vadd.f32 %v816, %v817
    %v819 = vsel %vm708, %v697, 0.0
    %v820 = vadd.f32 %v818, %v819
    %v821 = vsel %vm708, %v698, 0.0
    %v822 = vadd.f32 %v820, %v821
    %v823 = vsel %vm708, %v699, 0.0
    %v824 = vadd.f32 %v822, %v823
    %v825 = vsel %vm708, %v700, 0.0
    %v826 = vadd.f32 %v824, %v825
    %v827 = vsel %vm708, %v701, 0.0
    %v828 = vadd.f32 %v826, %v827
    %v829 = vsel %vm708, %v702, 0.0
    %v830 = vadd.f32 %v828, %v829
    %v831 = vsel %vm708, %v703, 0.0
    %v832 = vadd.f32 %v830, %v831
    %v833 = vsel %vm708, %v704, 0.0
    %v834 = vadd.f32 %v832, %v833
    %v835 = vsel %vm708, %v705, 0.0
    %v836 = vadd.f32 %v834, %v835
    %v837 = vsel %vm708, %v706, 0.0
    %v838 = vadd.f32 %v836, %v837
    %v839 = vsel %vm708, %v707, 0.0
    %v840 = vadd.f32 %v838, %v839
    %v841 = vrot.slane %v840, 4
    %v842 = vadd.f32 %v840, %v841
    %v843 = vrot.slane %v842, 2
    %v844 = vadd.f32 %v842, %v843
    %v845 = vrot.slane %v844, 1
    %v846 = vadd.f32 %v844, %v845
    %v847 = vrcp.pop 256.0
    %v848 = vmul.f32 %v777, %v847
    %v849 = vmul.f32 %v846, %v847
    %v850 = vpack.c.bf16 %v848, %v848
    %v851 = vpack.c.bf16 %v849, %v849
    %v852 = vld [vmem:[%s3] sm:$0xff]
    %v853 = vld [vmem:[%s3 + $0x8] sm:$0xff]
    %v854 = vld [vmem:[%s3 + $0x10] sm:$0xff]
    %v855 = vld [vmem:[%s3 + $0x18] sm:$0xff]
    %v856 = vld [vmem:[%s3 + $0x20] sm:$0xff]
    %v857 = vld [vmem:[%s3 + $0x28] sm:$0xff]
    %v858 = vld [vmem:[%s3 + $0x30] sm:$0xff]
    %v859 = vld [vmem:[%s3 + $0x38] sm:$0xff]
    %v860 = vld [vmem:[%s3 + $0x40] sm:$0xff]
    %v861 = vld [vmem:[%s3 + $0x48] sm:$0xff]
    %v862 = vld [vmem:[%s3 + $0x50] sm:$0xff]
    %v863 = vld [vmem:[%s3 + $0x58] sm:$0xff]
    %v864 = vld [vmem:[%s3 + $0x60] sm:$0xff]
    %v865 = vld [vmem:[%s3 + $0x68] sm:$0xff]
    %v866 = vld [vmem:[%s3 + $0x70] sm:$0xff]
    %v867 = vld [vmem:[%s3 + $0x78] sm:$0xff]
    %v868 = vld [vmem:[%s3 + $0x80] sm:$0xff]
    %v869 = vld [vmem:[%s3 + $0x88] sm:$0xff]
    %v870 = vld [vmem:[%s3 + $0x90] sm:$0xff]
    %v871 = vld [vmem:[%s3 + $0x98] sm:$0xff]
    %v872 = vld [vmem:[%s3 + $0xa0] sm:$0xff]
    %v873 = vld [vmem:[%s3 + $0xa8] sm:$0xff]
    %v874 = vld [vmem:[%s3 + $0xb0] sm:$0xff]
    %v875 = vld [vmem:[%s3 + $0xb8] sm:$0xff]
    %v876 = vld [vmem:[%s3 + $0xc0] sm:$0xff]
    %v877 = vld [vmem:[%s3 + $0xc8] sm:$0xff]
    %v878 = vld [vmem:[%s3 + $0xd0] sm:$0xff]
    %v879 = vld [vmem:[%s3 + $0xd8] sm:$0xff]
    %v880 = vld [vmem:[%s3 + $0xe0] sm:$0xff]
    %v881 = vld [vmem:[%s3 + $0xe8] sm:$0xff]
    %v882 = vld [vmem:[%s3 + $0xf0] sm:$0xff]
    %v883 = vld [vmem:[%s3 + $0xf8] sm:$0xff]
    %v884 = vld [vmem:[%s3 + $0x100] sm:$0xff]
    %v885 = vld [vmem:[%s3 + $0x108] sm:$0xff]
    %v886 = vld [vmem:[%s3 + $0x110] sm:$0xff]
    %v887 = vld [vmem:[%s3 + $0x118] sm:$0xff]
    %v888 = vld [vmem:[%s3 + $0x120] sm:$0xff]
    %v889 = vld [vmem:[%s3 + $0x128] sm:$0xff]
    %v890 = vld [vmem:[%s3 + $0x130] sm:$0xff]
    %v891 = vld [vmem:[%s3 + $0x138] sm:$0xff]
    %v892 = vld [vmem:[%s3 + $0x140] sm:$0xff]
    %v893 = vld [vmem:[%s3 + $0x148] sm:$0xff]
    %v894 = vld [vmem:[%s3 + $0x150] sm:$0xff]
    %v895 = vld [vmem:[%s3 + $0x158] sm:$0xff]
    %v896 = vld [vmem:[%s3 + $0x160] sm:$0xff]
    %v897 = vld [vmem:[%s3 + $0x168] sm:$0xff]
    %v898 = vld [vmem:[%s3 + $0x170] sm:$0xff]
    %v899 = vld [vmem:[%s3 + $0x178] sm:$0xff]
    %v900 = vld [vmem:[%s3 + $0x180] sm:$0xff]
    %v901 = vld [vmem:[%s3 + $0x188] sm:$0xff]
    %v902 = vld [vmem:[%s3 + $0x190] sm:$0xff]
    %v903 = vld [vmem:[%s3 + $0x198] sm:$0xff]
    %v904 = vld [vmem:[%s3 + $0x1a0] sm:$0xff]
    %v905 = vld [vmem:[%s3 + $0x1a8] sm:$0xff]
    %v906 = vld [vmem:[%s3 + $0x1b0] sm:$0xff]
    %v907 = vld [vmem:[%s3 + $0x1b8] sm:$0xff]
    %v908 = vld [vmem:[%s3 + $0x1c0] sm:$0xff]
    %v909 = vld [vmem:[%s3 + $0x1c8] sm:$0xff]
    %v910 = vld [vmem:[%s3 + $0x1d0] sm:$0xff]
    %v911 = vld [vmem:[%s3 + $0x1d8] sm:$0xff]
    %v912 = vld [vmem:[%s3 + $0x1e0] sm:$0xff]
    %v913 = vld [vmem:[%s3 + $0x1e8] sm:$0xff]
    %v914 = vld [vmem:[%s3 + $0x1f0] sm:$0xff]
    %v915 = vld [vmem:[%s3 + $0x1f8] sm:$0xff]
    %v916 = vld [vmem:[%s4] sm:$0xff]
    %v917 = vld [vmem:[%s4 + $0x8] sm:$0xff]
    %v920 = vlaneseq
    %v921 = vshrl.u32 %v920, 7
    %v922 = vsub.s32 0, %v921
    %v923 = vrot.slane %v916, %v922
    %v924 = vlaneseq
    %v925 = vshrl.u32 %v924, 7
    %v926 = vsub.s32 1, %v925
    %v927 = vrot.slane %v916, %v926
    %v928 = vlaneseq
    %v929 = vshrl.u32 %v928, 7
    %v930 = vsub.s32 2, %v929
    %v931 = vrot.slane %v916, %v930
    %v932 = vlaneseq
    %v933 = vshrl.u32 %v932, 7
    %v934 = vsub.s32 3, %v933
    %v935 = vrot.slane %v916, %v934
    %v936 = vlaneseq
    %v937 = vshrl.u32 %v936, 7
    %v938 = vsub.s32 4, %v937
    %v939 = vrot.slane %v916, %v938
    %v940 = vlaneseq
    %v941 = vshrl.u32 %v940, 7
    %v942 = vsub.s32 5, %v941
    %v943 = vrot.slane %v916, %v942
    %v944 = vlaneseq
    %v945 = vshrl.u32 %v944, 7
    %v946 = vsub.s32 6, %v945
    %v947 = vrot.slane %v916, %v946
    %v948 = vlaneseq
    %v949 = vshrl.u32 %v948, 7
    %v950 = vsub.s32 7, %v949
    %v951 = vrot.slane %v916, %v950
    %v952 = vlaneseq
    %v953 = vshrl.u32 %v952, 7
    %v954 = vsub.s32 0, %v953
    %v955 = vrot.slane %v917, %v954
    %v956 = vlaneseq
    %v957 = vshrl.u32 %v956, 7
    %v958 = vsub.s32 1, %v957
    %v959 = vrot.slane %v917, %v958
    %v960 = vlaneseq
    %v961 = vshrl.u32 %v960, 7
    %v962 = vsub.s32 2, %v961
    %v963 = vrot.slane %v917, %v962
    %v964 = vlaneseq
    %v965 = vshrl.u32 %v964, 7
    %v966 = vsub.s32 3, %v965
    %v967 = vrot.slane %v917, %v966
    %v968 = vlaneseq
    %v969 = vshrl.u32 %v968, 7
    %v970 = vsub.s32 4, %v969
    %v971 = vrot.slane %v917, %v970
    %v972 = vlaneseq
    %v973 = vshrl.u32 %v972, 7
    %v974 = vsub.s32 5, %v973
    %v975 = vrot.slane %v917, %v974
    %v976 = vlaneseq
    %v977 = vshrl.u32 %v976, 7
    %v978 = vsub.s32 6, %v977
    %v979 = vrot.slane %v917, %v978
    %v980 = vlaneseq
    %v981 = vshrl.u32 %v980, 7
    %v982 = vsub.s32 7, %v981
    %v983 = vrot.slane %v917, %v982
    %v1002 = vunpack.c.l.b16 %v850
    %v1003 = vunpack.c.l.b16 %v851
    %vm1004 = vcmask 1041409
    %v1005 = vsel %vm1004, %v1003, %v1002
    %v1006 = vpack.c.b16 %v1005, %v1005
    %v1071 = vunpack.c.l.b16 %v852
    %v1072 = vunpack.c.h.b16 %v852
    %v1073 = vunpack.c.l.b16 %v853
    %v1074 = vunpack.c.h.b16 %v853
    %v1075 = vunpack.c.l.b16 %v854
    %v1076 = vunpack.c.h.b16 %v854
    %v1077 = vunpack.c.l.b16 %v855
    %v1078 = vunpack.c.h.b16 %v855
    %v1079 = vunpack.c.l.b16 %v856
    %v1080 = vunpack.c.h.b16 %v856
    %v1081 = vunpack.c.l.b16 %v857
    %v1082 = vunpack.c.h.b16 %v857
    %v1083 = vunpack.c.l.b16 %v858
    %v1084 = vunpack.c.h.b16 %v858
    %v1085 = vunpack.c.l.b16 %v859
    %v1086 = vunpack.c.h.b16 %v859
    %v1087 = vunpack.c.l.b16 %v860
    %v1088 = vunpack.c.h.b16 %v860
    %v1089 = vunpack.c.l.b16 %v861
    %v1090 = vunpack.c.h.b16 %v861
    %v1091 = vunpack.c.l.b16 %v862
    %v1092 = vunpack.c.h.b16 %v862
    %v1093 = vunpack.c.l.b16 %v863
    %v1094 = vunpack.c.h.b16 %v863
    %v1095 = vunpack.c.l.b16 %v864
    %v1096 = vunpack.c.h.b16 %v864
    %v1097 = vunpack.c.l.b16 %v865
    %v1098 = vunpack.c.h.b16 %v865
    %v1099 = vunpack.c.l.b16 %v866
    %v1100 = vunpack.c.h.b16 %v866
    %v1101 = vunpack.c.l.b16 %v867
    %v1102 = vunpack.c.h.b16 %v867
    %v1103 = vunpack.c.l.b16 %v868
    %v1104 = vunpack.c.h.b16 %v868
    %v1105 = vunpack.c.l.b16 %v869
    %v1106 = vunpack.c.h.b16 %v869
    %v1107 = vunpack.c.l.b16 %v870
    %v1108 = vunpack.c.h.b16 %v870
    %v1109 = vunpack.c.l.b16 %v871
    %v1110 = vunpack.c.h.b16 %v871
    %v1111 = vunpack.c.l.b16 %v872
    %v1112 = vunpack.c.h.b16 %v872
    %v1113 = vunpack.c.l.b16 %v873
    %v1114 = vunpack.c.h.b16 %v873
    %v1115 = vunpack.c.l.b16 %v874
    %v1116 = vunpack.c.h.b16 %v874
    %v1117 = vunpack.c.l.b16 %v875
    %v1118 = vunpack.c.h.b16 %v875
    %v1119 = vunpack.c.l.b16 %v876
    %v1120 = vunpack.c.h.b16 %v876
    %v1121 = vunpack.c.l.b16 %v877
    %v1122 = vunpack.c.h.b16 %v877
    %v1123 = vunpack.c.l.b16 %v878
    %v1124 = vunpack.c.h.b16 %v878
    %v1125 = vunpack.c.l.b16 %v879
    %v1126 = vunpack.c.h.b16 %v879
    %v1127 = vunpack.c.l.b16 %v880
    %v1128 = vunpack.c.h.b16 %v880
    %v1129 = vunpack.c.l.b16 %v881
    %v1130 = vunpack.c.h.b16 %v881
    %v1131 = vunpack.c.l.b16 %v882
    %v1132 = vunpack.c.h.b16 %v882
    %v1133 = vunpack.c.l.b16 %v883
    %v1134 = vunpack.c.h.b16 %v883
    %v1135 = vunpack.c.l.b16 %v884
    %v1136 = vunpack.c.h.b16 %v884
    %v1137 = vunpack.c.l.b16 %v885
    %v1138 = vunpack.c.h.b16 %v885
    %v1139 = vunpack.c.l.b16 %v886
    %v1140 = vunpack.c.h.b16 %v886
    %v1141 = vunpack.c.l.b16 %v887
    %v1142 = vunpack.c.h.b16 %v887
    %v1143 = vunpack.c.l.b16 %v888
    %v1144 = vunpack.c.h.b16 %v888
    %v1145 = vunpack.c.l.b16 %v889
    %v1146 = vunpack.c.h.b16 %v889
    %v1147 = vunpack.c.l.b16 %v890
    %v1148 = vunpack.c.h.b16 %v890
    %v1149 = vunpack.c.l.b16 %v891
    %v1150 = vunpack.c.h.b16 %v891
    %v1151 = vunpack.c.l.b16 %v892
    %v1152 = vunpack.c.h.b16 %v892
    %v1153 = vunpack.c.l.b16 %v893
    %v1154 = vunpack.c.h.b16 %v893
    %v1155 = vunpack.c.l.b16 %v894
    %v1156 = vunpack.c.h.b16 %v894
    %v1157 = vunpack.c.l.b16 %v895
    %v1158 = vunpack.c.h.b16 %v895
    %v1159 = vunpack.c.l.b16 %v896
    %v1160 = vunpack.c.h.b16 %v896
    %v1161 = vunpack.c.l.b16 %v897
    %v1162 = vunpack.c.h.b16 %v897
    %v1163 = vunpack.c.l.b16 %v898
    %v1164 = vunpack.c.h.b16 %v898
    %v1165 = vunpack.c.l.b16 %v899
    %v1166 = vunpack.c.h.b16 %v899
    %v1167 = vunpack.c.l.b16 %v900
    %v1168 = vunpack.c.h.b16 %v900
    %v1169 = vunpack.c.l.b16 %v901
    %v1170 = vunpack.c.h.b16 %v901
    %v1171 = vunpack.c.l.b16 %v902
    %v1172 = vunpack.c.h.b16 %v902
    %v1173 = vunpack.c.l.b16 %v903
    %v1174 = vunpack.c.h.b16 %v903
    %v1175 = vunpack.c.l.b16 %v904
    %v1176 = vunpack.c.h.b16 %v904
    %v1177 = vunpack.c.l.b16 %v905
    %v1178 = vunpack.c.h.b16 %v905
    %v1179 = vunpack.c.l.b16 %v906
    %v1180 = vunpack.c.h.b16 %v906
    %v1181 = vunpack.c.l.b16 %v907
    %v1182 = vunpack.c.h.b16 %v907
    %v1183 = vunpack.c.l.b16 %v908
    %v1184 = vunpack.c.h.b16 %v908
    %v1185 = vunpack.c.l.b16 %v909
    %v1186 = vunpack.c.h.b16 %v909
    %v1187 = vunpack.c.l.b16 %v910
    %v1188 = vunpack.c.h.b16 %v910
    %v1189 = vunpack.c.l.b16 %v911
    %v1190 = vunpack.c.h.b16 %v911
    %v1191 = vunpack.c.l.b16 %v912
    %v1192 = vunpack.c.h.b16 %v912
    %v1193 = vunpack.c.l.b16 %v913
    %v1194 = vunpack.c.h.b16 %v913
    %v1195 = vunpack.c.l.b16 %v914
    %v1196 = vunpack.c.h.b16 %v914
    %v1197 = vunpack.c.l.b16 %v915
    %v1198 = vunpack.c.h.b16 %v915
    %v1199 = vpack.c.b16 %v1087, %v1071
    %v1200 = vpack.c.b16 %v1088, %v1072
    %v1201 = vpack.c.b16 %v1089, %v1073
    %v1202 = vpack.c.b16 %v1090, %v1074
    %v1203 = vpack.c.b16 %v1091, %v1075
    %v1204 = vpack.c.b16 %v1092, %v1076
    %v1205 = vpack.c.b16 %v1093, %v1077
    %v1206 = vpack.c.b16 %v1094, %v1078
    %v1207 = vpack.c.b16 %v1095, %v1079
    %v1208 = vpack.c.b16 %v1096, %v1080
    %v1209 = vpack.c.b16 %v1097, %v1081
    %v1210 = vpack.c.b16 %v1098, %v1082
    %v1211 = vpack.c.b16 %v1099, %v1083
    %v1212 = vpack.c.b16 %v1100, %v1084
    %v1213 = vpack.c.b16 %v1101, %v1085
    %v1214 = vpack.c.b16 %v1102, %v1086
    %v1215 = vpack.c.b16 %v1119, %v1103
    %v1216 = vpack.c.b16 %v1120, %v1104
    %v1217 = vpack.c.b16 %v1121, %v1105
    %v1218 = vpack.c.b16 %v1122, %v1106
    %v1219 = vpack.c.b16 %v1123, %v1107
    %v1220 = vpack.c.b16 %v1124, %v1108
    %v1221 = vpack.c.b16 %v1125, %v1109
    %v1222 = vpack.c.b16 %v1126, %v1110
    %v1223 = vpack.c.b16 %v1127, %v1111
    %v1224 = vpack.c.b16 %v1128, %v1112
    %v1225 = vpack.c.b16 %v1129, %v1113
    %v1226 = vpack.c.b16 %v1130, %v1114
    %v1227 = vpack.c.b16 %v1131, %v1115
    %v1228 = vpack.c.b16 %v1132, %v1116
    %v1229 = vpack.c.b16 %v1133, %v1117
    %v1230 = vpack.c.b16 %v1134, %v1118
    %v1231 = vpack.c.b16 %v1151, %v1135
    %v1232 = vpack.c.b16 %v1152, %v1136
    %v1233 = vpack.c.b16 %v1153, %v1137
    %v1234 = vpack.c.b16 %v1154, %v1138
    %v1235 = vpack.c.b16 %v1155, %v1139
    %v1236 = vpack.c.b16 %v1156, %v1140
    %v1237 = vpack.c.b16 %v1157, %v1141
    %v1238 = vpack.c.b16 %v1158, %v1142
    %v1239 = vpack.c.b16 %v1159, %v1143
    %v1240 = vpack.c.b16 %v1160, %v1144
    %v1241 = vpack.c.b16 %v1161, %v1145
    %v1242 = vpack.c.b16 %v1162, %v1146
    %v1243 = vpack.c.b16 %v1163, %v1147
    %v1244 = vpack.c.b16 %v1164, %v1148
    %v1245 = vpack.c.b16 %v1165, %v1149
    %v1246 = vpack.c.b16 %v1166, %v1150
    %v1247 = vpack.c.b16 %v1183, %v1167
    %v1248 = vpack.c.b16 %v1184, %v1168
    %v1249 = vpack.c.b16 %v1185, %v1169
    %v1250 = vpack.c.b16 %v1186, %v1170
    %v1251 = vpack.c.b16 %v1187, %v1171
    %v1252 = vpack.c.b16 %v1188, %v1172
    %v1253 = vpack.c.b16 %v1189, %v1173
    %v1254 = vpack.c.b16 %v1190, %v1174
    %v1255 = vpack.c.b16 %v1191, %v1175
    %v1256 = vpack.c.b16 %v1192, %v1176
    %v1257 = vpack.c.b16 %v1193, %v1177
    %v1258 = vpack.c.b16 %v1194, %v1178
    %v1259 = vpack.c.b16 %v1195, %v1179
    %v1260 = vpack.c.b16 %v1196, %v1180
    %v1261 = vpack.c.b16 %v1197, %v1181
    %v1262 = vpack.c.b16 %v1198, %v1182
    %v1328 = vsel %vm708, %v1006, 0
    %1330 = vmatprep.subr.bf16.mxu0 %v1200
    %1331 = vmatpush1.bf16.msra.mxu0 %v1199
    %1332 = vmatprep.subr.bf16.mxu0 %v1216
    %1333 = vmatpush1.bf16.msra.mxu0 %v1215
    %1334 = vmatprep.subr.bf16.mxu0 %v1232
    %1335 = vmatpush1.bf16.msra.mxu0 %v1231
    %1336 = vmatprep.subr.bf16.mxu0 %v1248
    %1337 = vmatpush1.bf16.msra.mxu0 %v1247
    %1338 = vmatprep.subr.bf16.mxu0 0
    %1339 = vmatpush1.bf16.msra.mxu0 0
    %1340 = vmatprep.subr.bf16.mxu0 0
    %1341 = vmatpush1.bf16.msra.mxu0 0
    %1342 = vmatprep.subr.bf16.mxu0 0
    %1343 = vmatpush1.bf16.msra.mxu0 0
    %1344 = vmatprep.subr.bf16.mxu0 0
    %1345 = vmatpush1.bf16.msra.mxu0 0
    %1346 = vmatprep.subr.bf16.mxu0 0
    %1347 = vmatpush1.bf16.msra.mxu0 0
    %1348 = vmatprep.subr.bf16.mxu0 0
    %1349 = vmatpush1.bf16.msra.mxu0 0
    %1350 = vmatprep.subr.bf16.mxu0 0
    %1351 = vmatpush1.bf16.msra.mxu0 0
    %1352 = vmatprep.subr.bf16.mxu0 0
    %1353 = vmatpush1.bf16.msra.mxu0 0
    %1354 = vmatprep.subr.bf16.mxu0 0
    %1355 = vmatpush1.bf16.msra.mxu0 0
    %1356 = vmatprep.subr.bf16.mxu0 0
    %1357 = vmatpush1.bf16.msra.mxu0 0
    %1358 = vmatprep.subr.bf16.mxu0 0
    %1359 = vmatpush1.bf16.msra.mxu0 0
    %1360 = vmatprep.subr.bf16.mxu0 0
    %1361 = vmatpush1.bf16.msra.mxu0 0
    %1362 = vmatprep.mubr.bf16.mxu0 0
    %1363 = vmatmul.mubr.bf16.gmra.mrb[0].mxu0 %v1328
    %v1364 = vpop.f32.mrb[0].mxu0
    %v1365 = vadd.f32 %v923, %v1364
    %v1366 = vpop.f32.mrb[0].mxu0
    %v1367 = vadd.f32 %v927, %v1366
    %v1368 = vpop.f32.mrb[0].mxu0
    %v1369 = vpop.f32.mrb[0].mxu0
    %1370 = vdwg.mxu0
    %1371 = vmatprep.subr.bf16.mxu0 %v1202
    %1372 = vmatpush1.bf16.msra.mxu0 %v1201
    %1373 = vmatprep.subr.bf16.mxu0 %v1218
    %1374 = vmatpush1.bf16.msra.mxu0 %v1217
    %1375 = vmatprep.subr.bf16.mxu0 %v1234
    %1376 = vmatpush1.bf16.msra.mxu0 %v1233
    %1377 = vmatprep.subr.bf16.mxu0 %v1250
    %1378 = vmatpush1.bf16.msra.mxu0 %v1249
    %1379 = vmatprep.subr.bf16.mxu0 0
    %1380 = vmatpush1.bf16.msra.mxu0 0
    %1381 = vmatprep.subr.bf16.mxu0 0
    %1382 = vmatpush1.bf16.msra.mxu0 0
    %1383 = vmatprep.subr.bf16.mxu0 0
    %1384 = vmatpush1.bf16.msra.mxu0 0
    %1385 = vmatprep.subr.bf16.mxu0 0
    %1386 = vmatpush1.bf16.msra.mxu0 0
    %1387 = vmatprep.subr.bf16.mxu0 0
    %1388 = vmatpush1.bf16.msra.mxu0 0
    %1389 = vmatprep.subr.bf16.mxu0 0
    %1390 = vmatpush1.bf16.msra.mxu0 0
    %1391 = vmatprep.subr.bf16.mxu0 0
    %1392 = vmatpush1.bf16.msra.mxu0 0
    %1393 = vmatprep.subr.bf16.mxu0 0
    %1394 = vmatpush1.bf16.msra.mxu0 0
    %1395 = vmatprep.subr.bf16.mxu0 0
    %1396 = vmatpush1.bf16.msra.mxu0 0
    %1397 = vmatprep.subr.bf16.mxu0 0
    %1398 = vmatpush1.bf16.msra.mxu0 0
    %1399 = vmatprep.subr.bf16.mxu0 0
    %1400 = vmatpush1.bf16.msra.mxu0 0
    %1401 = vmatprep.subr.bf16.mxu0 0
    %1402 = vmatpush1.bf16.msra.mxu0 0
    %1403 = vmatprep.mubr.bf16.mxu0 0
    %1404 = vmatmul.mubr.bf16.gmra.mrb[0].mxu0 %v1328
    %v1405 = vpop.f32.mrb[0].mxu0
    %v1406 = vadd.f32 %v931, %v1405
    %v1407 = vpop.f32.mrb[0].mxu0
    %v1408 = vadd.f32 %v935, %v1407
    %v1409 = vpop.f32.mrb[0].mxu0
    %v1410 = vpop.f32.mrb[0].mxu0
    %1411 = vdwg.mxu0
    %1412 = vmatprep.subr.bf16.mxu0 %v1204
    %1413 = vmatpush1.bf16.msra.mxu0 %v1203
    %1414 = vmatprep.subr.bf16.mxu0 %v1220
    %1415 = vmatpush1.bf16.msra.mxu0 %v1219
    %1416 = vmatprep.subr.bf16.mxu0 %v1236
    %1417 = vmatpush1.bf16.msra.mxu0 %v1235
    %1418 = vmatprep.subr.bf16.mxu0 %v1252
    %1419 = vmatpush1.bf16.msra.mxu0 %v1251
    %1420 = vmatprep.subr.bf16.mxu0 0
    %1421 = vmatpush1.bf16.msra.mxu0 0
    %1422 = vmatprep.subr.bf16.mxu0 0
    %1423 = vmatpush1.bf16.msra.mxu0 0
    %1424 = vmatprep.subr.bf16.mxu0 0
    %1425 = vmatpush1.bf16.msra.mxu0 0
    %1426 = vmatprep.subr.bf16.mxu0 0
    %1427 = vmatpush1.bf16.msra.mxu0 0
    %1428 = vmatprep.subr.bf16.mxu0 0
    %1429 = vmatpush1.bf16.msra.mxu0 0
    %1430 = vmatprep.subr.bf16.mxu0 0
    %1431 = vmatpush1.bf16.msra.mxu0 0
    %1432 = vmatprep.subr.bf16.mxu0 0
    %1433 = vmatpush1.bf16.msra.mxu0 0
    %1434 = vmatprep.subr.bf16.mxu0 0
    %1435 = vmatpush1.bf16.msra.mxu0 0
    %1436 = vmatprep.subr.bf16.mxu0 0
    %1437 = vmatpush1.bf16.msra.mxu0 0
    %1438 = vmatprep.subr.bf16.mxu0 0
    %1439 = vmatpush1.bf16.msra.mxu0 0
    %1440 = vmatprep.subr.bf16.mxu0 0
    %1441 = vmatpush1.bf16.msra.mxu0 0
    %1442 = vmatprep.subr.bf16.mxu0 0
    %1443 = vmatpush1.bf16.msra.mxu0 0
    %1444 = vmatprep.mubr.bf16.mxu0 0
    %1445 = vmatmul.mubr.bf16.gmra.mrb[0].mxu0 %v1328
    %v1446 = vpop.f32.mrb[0].mxu0
    %v1447 = vadd.f32 %v939, %v1446
    %v1448 = vpop.f32.mrb[0].mxu0
    %v1449 = vadd.f32 %v943, %v1448
    %v1450 = vpop.f32.mrb[0].mxu0
    %v1451 = vpop.f32.mrb[0].mxu0
    %1452 = vdwg.mxu0
    %1453 = vmatprep.subr.bf16.mxu0 %v1206
    %1454 = vmatpush1.bf16.msra.mxu0 %v1205
    %1455 = vmatprep.subr.bf16.mxu0 %v1222
    %1456 = vmatpush1.bf16.msra.mxu0 %v1221
    %1457 = vmatprep.subr.bf16.mxu0 %v1238
    %1458 = vmatpush1.bf16.msra.mxu0 %v1237
    %1459 = vmatprep.subr.bf16.mxu0 %v1254
    %1460 = vmatpush1.bf16.msra.mxu0 %v1253
    %1461 = vmatprep.subr.bf16.mxu0 0
    %1462 = vmatpush1.bf16.msra.mxu0 0
    %1463 = vmatprep.subr.bf16.mxu0 0
    %1464 = vmatpush1.bf16.msra.mxu0 0
    %1465 = vmatprep.subr.bf16.mxu0 0
    %1466 = vmatpush1.bf16.msra.mxu0 0
    %1467 = vmatprep.subr.bf16.mxu0 0
    %1468 = vmatpush1.bf16.msra.mxu0 0
    %1469 = vmatprep.subr.bf16.mxu0 0
    %1470 = vmatpush1.bf16.msra.mxu0 0
    %1471 = vmatprep.subr.bf16.mxu0 0
    %1472 = vmatpush1.bf16.msra.mxu0 0
    %1473 = vmatprep.subr.bf16.mxu0 0
    %1474 = vmatpush1.bf16.msra.mxu0 0
    %1475 = vmatprep.subr.bf16.mxu0 0
    %1476 = vmatpush1.bf16.msra.mxu0 0
    %1477 = vmatprep.subr.bf16.mxu0 0
    %1478 = vmatpush1.bf16.msra.mxu0 0
    %1479 = vmatprep.subr.bf16.mxu0 0
    %1480 = vmatpush1.bf16.msra.mxu0 0
    %1481 = vmatprep.subr.bf16.mxu0 0
    %1482 = vmatpush1.bf16.msra.mxu0 0
    %1483 = vmatprep.subr.bf16.mxu0 0
    %1484 = vmatpush1.bf16.msra.mxu0 0
    %1485 = vmatprep.mubr.bf16.mxu0 0
    %1486 = vmatmul.mubr.bf16.gmra.mrb[0].mxu0 %v1328
    %v1487 = vpop.f32.mrb[0].mxu0
    %v1488 = vadd.f32 %v947, %v1487
    %v1489 = vpop.f32.mrb[0].mxu0
    %v1490 = vadd.f32 %v951, %v1489
    %v1491 = vpop.f32.mrb[0].mxu0
    %v1492 = vpop.f32.mrb[0].mxu0
    %1493 = vdwg.mxu0
    %1494 = vmatprep.subr.bf16.mxu0 %v1208
    %1495 = vmatpush1.bf16.msra.mxu0 %v1207
    %1496 = vmatprep.subr.bf16.mxu0 %v1224
    %1497 = vmatpush1.bf16.msra.mxu0 %v1223
    %1498 = vmatprep.subr.bf16.mxu0 %v1240
    %1499 = vmatpush1.bf16.msra.mxu0 %v1239
    %1500 = vmatprep.subr.bf16.mxu0 %v1256
    %1501 = vmatpush1.bf16.msra.mxu0 %v1255
    %1502 = vmatprep.subr.bf16.mxu0 0
    %1503 = vmatpush1.bf16.msra.mxu0 0
    %1504 = vmatprep.subr.bf16.mxu0 0
    %1505 = vmatpush1.bf16.msra.mxu0 0
    %1506 = vmatprep.subr.bf16.mxu0 0
    %1507 = vmatpush1.bf16.msra.mxu0 0
    %1508 = vmatprep.subr.bf16.mxu0 0
    %1509 = vmatpush1.bf16.msra.mxu0 0
    %1510 = vmatprep.subr.bf16.mxu0 0
    %1511 = vmatpush1.bf16.msra.mxu0 0
    %1512 = vmatprep.subr.bf16.mxu0 0
    %1513 = vmatpush1.bf16.msra.mxu0 0
    %1514 = vmatprep.subr.bf16.mxu0 0
    %1515 = vmatpush1.bf16.msra.mxu0 0
    %1516 = vmatprep.subr.bf16.mxu0 0
    %1517 = vmatpush1.bf16.msra.mxu0 0
    %1518 = vmatprep.subr.bf16.mxu0 0
    %1519 = vmatpush1.bf16.msra.mxu0 0
    %1520 = vmatprep.subr.bf16.mxu0 0
    %1521 = vmatpush1.bf16.msra.mxu0 0
    %1522 = vmatprep.subr.bf16.mxu0 0
    %1523 = vmatpush1.bf16.msra.mxu0 0
    %1524 = vmatprep.subr.bf16.mxu0 0
    %1525 = vmatpush1.bf16.msra.mxu0 0
    %1526 = vmatprep.mubr.bf16.mxu0 0
    %1527 = vmatmul.mubr.bf16.gmra.mrb[0].mxu0 %v1328
    %v1528 = vpop.f32.mrb[0].mxu0
    %v1529 = vadd.f32 %v955, %v1528
    %v1530 = vpop.f32.mrb[0].mxu0
    %v1531 = vadd.f32 %v959, %v1530
    %v1532 = vpop.f32.mrb[0].mxu0
    %v1533 = vpop.f32.mrb[0].mxu0
    %1534 = vdwg.mxu0
    %1535 = vmatprep.subr.bf16.mxu0 %v1210
    %1536 = vmatpush1.bf16.msra.mxu0 %v1209
    %1537 = vmatprep.subr.bf16.mxu0 %v1226
    %1538 = vmatpush1.bf16.msra.mxu0 %v1225
    %1539 = vmatprep.subr.bf16.mxu0 %v1242
    %1540 = vmatpush1.bf16.msra.mxu0 %v1241
    %1541 = vmatprep.subr.bf16.mxu0 %v1258
    %1542 = vmatpush1.bf16.msra.mxu0 %v1257
    %1543 = vmatprep.subr.bf16.mxu0 0
    %1544 = vmatpush1.bf16.msra.mxu0 0
    %1545 = vmatprep.subr.bf16.mxu0 0
    %1546 = vmatpush1.bf16.msra.mxu0 0
    %1547 = vmatprep.subr.bf16.mxu0 0
    %1548 = vmatpush1.bf16.msra.mxu0 0
    %1549 = vmatprep.subr.bf16.mxu0 0
    %1550 = vmatpush1.bf16.msra.mxu0 0
    %1551 = vmatprep.subr.bf16.mxu0 0
    %1552 = vmatpush1.bf16.msra.mxu0 0
    %1553 = vmatprep.subr.bf16.mxu0 0
    %1554 = vmatpush1.bf16.msra.mxu0 0
    %1555 = vmatprep.subr.bf16.mxu0 0
    %1556 = vmatpush1.bf16.msra.mxu0 0
    %1557 = vmatprep.subr.bf16.mxu0 0
    %1558 = vmatpush1.bf16.msra.mxu0 0
    %1559 = vmatprep.subr.bf16.mxu0 0
    %1560 = vmatpush1.bf16.msra.mxu0 0
    %1561 = vmatprep.subr.bf16.mxu0 0
    %1562 = vmatpush1.bf16.msra.mxu0 0
    %1563 = vmatprep.subr.bf16.mxu0 0
    %1564 = vmatpush1.bf16.msra.mxu0 0
    %1565 = vmatprep.subr.bf16.mxu0 0
    %1566 = vmatpush1.bf16.msra.mxu0 0
    %1567 = vmatprep.mubr.bf16.mxu0 0
    %1568 = vmatmul.mubr.bf16.gmra.mrb[0].mxu0 %v1328
    %v1569 = vpop.f32.mrb[0].mxu0
    %v1570 = vadd.f32 %v963, %v1569
    %v1571 = vpop.f32.mrb[0].mxu0
    %v1572 = vadd.f32 %v967, %v1571
    %v1573 = vpop.f32.mrb[0].mxu0
    %v1574 = vpop.f32.mrb[0].mxu0
    %1575 = vdwg.mxu0
    %1576 = vmatprep.subr.bf16.mxu0 %v1212
    %1577 = vmatpush1.bf16.msra.mxu0 %v1211
    %1578 = vmatprep.subr.bf16.mxu0 %v1228
    %1579 = vmatpush1.bf16.msra.mxu0 %v1227
    %1580 = vmatprep.subr.bf16.mxu0 %v1244
    %1581 = vmatpush1.bf16.msra.mxu0 %v1243
    %1582 = vmatprep.subr.bf16.mxu0 %v1260
    %1583 = vmatpush1.bf16.msra.mxu0 %v1259
    %1584 = vmatprep.subr.bf16.mxu0 0
    %1585 = vmatpush1.bf16.msra.mxu0 0
    %1586 = vmatprep.subr.bf16.mxu0 0
    %1587 = vmatpush1.bf16.msra.mxu0 0
    %1588 = vmatprep.subr.bf16.mxu0 0
    %1589 = vmatpush1.bf16.msra.mxu0 0
    %1590 = vmatprep.subr.bf16.mxu0 0
    %1591 = vmatpush1.bf16.msra.mxu0 0
    %1592 = vmatprep.subr.bf16.mxu0 0
    %1593 = vmatpush1.bf16.msra.mxu0 0
    %1594 = vmatprep.subr.bf16.mxu0 0
    %1595 = vmatpush1.bf16.msra.mxu0 0
    %1596 = vmatprep.subr.bf16.mxu0 0
    %1597 = vmatpush1.bf16.msra.mxu0 0
    %1598 = vmatprep.subr.bf16.mxu0 0
    %1599 = vmatpush1.bf16.msra.mxu0 0
    %1600 = vmatprep.subr.bf16.mxu0 0
    %1601 = vmatpush1.bf16.msra.mxu0 0
    %1602 = vmatprep.subr.bf16.mxu0 0
    %1603 = vmatpush1.bf16.msra.mxu0 0
    %1604 = vmatprep.subr.bf16.mxu0 0
    %1605 = vmatpush1.bf16.msra.mxu0 0
    %1606 = vmatprep.subr.bf16.mxu0 0
    %1607 = vmatpush1.bf16.msra.mxu0 0
    %1608 = vmatprep.mubr.bf16.mxu0 0
    %1609 = vmatmul.mubr.bf16.gmra.mrb[0].mxu0 %v1328
    %v1610 = vpop.f32.mrb[0].mxu0
    %v1611 = vadd.f32 %v971, %v1610
    %v1612 = vpop.f32.mrb[0].mxu0
    %v1613 = vadd.f32 %v975, %v1612
    %v1614 = vpop.f32.mrb[0].mxu0
    %v1615 = vpop.f32.mrb[0].mxu0
    %1616 = vdwg.mxu0
    %1617 = vmatprep.subr.bf16.mxu0 %v1214
    %1618 = vmatpush1.bf16.msra.mxu0 %v1213
    %1619 = vmatprep.subr.bf16.mxu0 %v1230
    %1620 = vmatpush1.bf16.msra.mxu0 %v1229
    %1621 = vmatprep.subr.bf16.mxu0 %v1246
    %1622 = vmatpush1.bf16.msra.mxu0 %v1245
    %1623 = vmatprep.subr.bf16.mxu0 %v1262
    %1624 = vmatpush1.bf16.msra.mxu0 %v1261
    %1625 = vmatprep.subr.bf16.mxu0 0
    %1626 = vmatpush1.bf16.msra.mxu0 0
    %1627 = vmatprep.subr.bf16.mxu0 0
    %1628 = vmatpush1.bf16.msra.mxu0 0
    %1629 = vmatprep.subr.bf16.mxu0 0
    %1630 = vmatpush1.bf16.msra.mxu0 0
    %1631 = vmatprep.subr.bf16.mxu0 0
    %1632 = vmatpush1.bf16.msra.mxu0 0
    %1633 = vmatprep.subr.bf16.mxu0 0
    %1634 = vmatpush1.bf16.msra.mxu0 0
    %1635 = vmatprep.subr.bf16.mxu0 0
    %1636 = vmatpush1.bf16.msra.mxu0 0
    %1637 = vmatprep.subr.bf16.mxu0 0
    %1638 = vmatpush1.bf16.msra.mxu0 0
    %1639 = vmatprep.subr.bf16.mxu0 0
    %1640 = vmatpush1.bf16.msra.mxu0 0
    %1641 = vmatprep.subr.bf16.mxu0 0
    %1642 = vmatpush1.bf16.msra.mxu0 0
    %1643 = vmatprep.subr.bf16.mxu0 0
    %1644 = vmatpush1.bf16.msra.mxu0 0
    %1645 = vmatprep.subr.bf16.mxu0 0
    %1646 = vmatpush1.bf16.msra.mxu0 0
    %1647 = vmatprep.subr.bf16.mxu0 0
    %1648 = vmatpush1.bf16.msra.mxu0 0
    %1649 = vmatprep.mubr.bf16.mxu0 0
    %1650 = vmatmul.mubr.bf16.gmra.mrb[0].mxu0 %v1328
    %v1651 = vpop.f32.mrb[0].mxu0
    %v1652 = vadd.f32 %v979, %v1651
    %v1653 = vpop.f32.mrb[0].mxu0
    %v1654 = vadd.f32 %v983, %v1653
    %v1655 = vpop.f32.mrb[0].mxu0
    %v1656 = vpop.f32.mrb[0].mxu0
    %1657 = vdwg.mxu0
    %v1658 = vmax.f32 %v1365, 0.0
    %v1659 = vmax.f32 %v1367, 0.0
    %v1660 = vmax.f32 %v1406, 0.0
    %v1661 = vmax.f32 %v1408, 0.0
    %v1662 = vmax.f32 %v1447, 0.0
    %v1663 = vmax.f32 %v1449, 0.0
    %v1664 = vmax.f32 %v1488, 0.0
    %v1665 = vmax.f32 %v1490, 0.0
    %v1666 = vmax.f32 %v1529, 0.0
    %v1667 = vmax.f32 %v1531, 0.0
    %v1668 = vmax.f32 %v1570, 0.0
    %v1669 = vmax.f32 %v1572, 0.0
    %v1670 = vmax.f32 %v1611, 0.0
    %v1671 = vmax.f32 %v1613, 0.0
    %v1672 = vmax.f32 %v1652, 0.0
    %v1673 = vmax.f32 %v1654, 0.0
    %v1674 = vpack.c.bf16 %v1658, %v1658
    %v1675 = vpack.c.bf16 %v1659, %v1659
    %v1676 = vpack.c.bf16 %v1660, %v1660
    %v1677 = vpack.c.bf16 %v1661, %v1661
    %v1678 = vpack.c.bf16 %v1662, %v1662
    %v1679 = vpack.c.bf16 %v1663, %v1663
    %v1680 = vpack.c.bf16 %v1664, %v1664
    %v1681 = vpack.c.bf16 %v1665, %v1665
    %v1682 = vpack.c.bf16 %v1666, %v1666
    %v1683 = vpack.c.bf16 %v1667, %v1667
    %v1684 = vpack.c.bf16 %v1668, %v1668
    %v1685 = vpack.c.bf16 %v1669, %v1669
    %v1686 = vpack.c.bf16 %v1670, %v1670
    %v1687 = vpack.c.bf16 %v1671, %v1671
    %v1688 = vpack.c.bf16 %v1672, %v1672
    %v1689 = vpack.c.bf16 %v1673, %v1673
    %v1690 = vld [vmem:[%s5] sm:$0xf]
    %v1691 = vld [vmem:[%s5 + $0x4] sm:$0xf]
    %v1692 = vld [vmem:[%s5 + $0x8] sm:$0xf]
    %v1693 = vld [vmem:[%s5 + $0xc] sm:$0xf]
    %v1694 = vld [vmem:[%s5 + $0x10] sm:$0xf]
    %v1695 = vld [vmem:[%s5 + $0x14] sm:$0xf]
    %v1696 = vld [vmem:[%s5 + $0x18] sm:$0xf]
    %v1697 = vld [vmem:[%s5 + $0x1c] sm:$0xf]
    %v1698 = vld [vmem:[%s5 + $0x20] sm:$0xf]
    %v1699 = vld [vmem:[%s5 + $0x24] sm:$0xf]
    %v1700 = vld [vmem:[%s5 + $0x28] sm:$0xf]
    %v1701 = vld [vmem:[%s5 + $0x2c] sm:$0xf]
    %v1702 = vld [vmem:[%s5 + $0x30] sm:$0xf]
    %v1703 = vld [vmem:[%s5 + $0x34] sm:$0xf]
    %v1704 = vld [vmem:[%s5 + $0x38] sm:$0xf]
    %v1705 = vld [vmem:[%s5 + $0x3c] sm:$0xf]
    %v1706 = vld [vmem:[%s5 + $0x40] sm:$0xf]
    %v1707 = vld [vmem:[%s5 + $0x44] sm:$0xf]
    %v1708 = vld [vmem:[%s5 + $0x48] sm:$0xf]
    %v1709 = vld [vmem:[%s5 + $0x4c] sm:$0xf]
    %v1710 = vld [vmem:[%s5 + $0x50] sm:$0xf]
    %v1711 = vld [vmem:[%s5 + $0x54] sm:$0xf]
    %v1712 = vld [vmem:[%s5 + $0x58] sm:$0xf]
    %v1713 = vld [vmem:[%s5 + $0x5c] sm:$0xf]
    %v1714 = vld [vmem:[%s5 + $0x60] sm:$0xf]
    %v1715 = vld [vmem:[%s5 + $0x64] sm:$0xf]
    %v1716 = vld [vmem:[%s5 + $0x68] sm:$0xf]
    %v1717 = vld [vmem:[%s5 + $0x6c] sm:$0xf]
    %v1718 = vld [vmem:[%s5 + $0x70] sm:$0xf]
    %v1719 = vld [vmem:[%s5 + $0x74] sm:$0xf]
    %v1720 = vld [vmem:[%s5 + $0x78] sm:$0xf]
    %v1721 = vld [vmem:[%s5 + $0x7c] sm:$0xf]
    %v1722 = vld [vmem:[%s5 + $0x80] sm:$0xf]
    %v1723 = vld [vmem:[%s5 + $0x84] sm:$0xf]
    %v1724 = vld [vmem:[%s5 + $0x88] sm:$0xf]
    %v1725 = vld [vmem:[%s5 + $0x8c] sm:$0xf]
    %v1726 = vld [vmem:[%s5 + $0x90] sm:$0xf]
    %v1727 = vld [vmem:[%s5 + $0x94] sm:$0xf]
    %v1728 = vld [vmem:[%s5 + $0x98] sm:$0xf]
    %v1729 = vld [vmem:[%s5 + $0x9c] sm:$0xf]
    %v1730 = vld [vmem:[%s5 + $0xa0] sm:$0xf]
    %v1731 = vld [vmem:[%s5 + $0xa4] sm:$0xf]
    %v1732 = vld [vmem:[%s5 + $0xa8] sm:$0xf]
    %v1733 = vld [vmem:[%s5 + $0xac] sm:$0xf]
    %v1734 = vld [vmem:[%s5 + $0xb0] sm:$0xf]
    %v1735 = vld [vmem:[%s5 + $0xb4] sm:$0xf]
    %v1736 = vld [vmem:[%s5 + $0xb8] sm:$0xf]
    %v1737 = vld [vmem:[%s5 + $0xbc] sm:$0xf]
    %v1738 = vld [vmem:[%s5 + $0xc0] sm:$0xf]
    %v1739 = vld [vmem:[%s5 + $0xc4] sm:$0xf]
    %v1740 = vld [vmem:[%s5 + $0xc8] sm:$0xf]
    %v1741 = vld [vmem:[%s5 + $0xcc] sm:$0xf]
    %v1742 = vld [vmem:[%s5 + $0xd0] sm:$0xf]
    %v1743 = vld [vmem:[%s5 + $0xd4] sm:$0xf]
    %v1744 = vld [vmem:[%s5 + $0xd8] sm:$0xf]
    %v1745 = vld [vmem:[%s5 + $0xdc] sm:$0xf]
    %v1746 = vld [vmem:[%s5 + $0xe0] sm:$0xf]
    %v1747 = vld [vmem:[%s5 + $0xe4] sm:$0xf]
    %v1748 = vld [vmem:[%s5 + $0xe8] sm:$0xf]
    %v1749 = vld [vmem:[%s5 + $0xec] sm:$0xf]
    %v1750 = vld [vmem:[%s5 + $0xf0] sm:$0xf]
    %v1751 = vld [vmem:[%s5 + $0xf4] sm:$0xf]
    %v1752 = vld [vmem:[%s5 + $0xf8] sm:$0xf]
    %v1753 = vld [vmem:[%s5 + $0xfc] sm:$0xf]
    %v1754 = vld [vmem:[%s5 + $0x100] sm:$0xf]
    %v1755 = vld [vmem:[%s5 + $0x104] sm:$0xf]
    %v1756 = vld [vmem:[%s5 + $0x108] sm:$0xf]
    %v1757 = vld [vmem:[%s5 + $0x10c] sm:$0xf]
    %v1758 = vld [vmem:[%s5 + $0x110] sm:$0xf]
    %v1759 = vld [vmem:[%s5 + $0x114] sm:$0xf]
    %v1760 = vld [vmem:[%s5 + $0x118] sm:$0xf]
    %v1761 = vld [vmem:[%s5 + $0x11c] sm:$0xf]
    %v1762 = vld [vmem:[%s5 + $0x120] sm:$0xf]
    %v1763 = vld [vmem:[%s5 + $0x124] sm:$0xf]
    %v1764 = vld [vmem:[%s5 + $0x128] sm:$0xf]
    %v1765 = vld [vmem:[%s5 + $0x12c] sm:$0xf]
    %v1766 = vld [vmem:[%s5 + $0x130] sm:$0xf]
    %v1767 = vld [vmem:[%s5 + $0x134] sm:$0xf]
    %v1768 = vld [vmem:[%s5 + $0x138] sm:$0xf]
    %v1769 = vld [vmem:[%s5 + $0x13c] sm:$0xf]
    %v1770 = vld [vmem:[%s5 + $0x140] sm:$0xf]
    %v1771 = vld [vmem:[%s5 + $0x144] sm:$0xf]
    %v1772 = vld [vmem:[%s5 + $0x148] sm:$0xf]
    %v1773 = vld [vmem:[%s5 + $0x14c] sm:$0xf]
    %v1774 = vld [vmem:[%s5 + $0x150] sm:$0xf]
    %v1775 = vld [vmem:[%s5 + $0x154] sm:$0xf]
    %v1776 = vld [vmem:[%s5 + $0x158] sm:$0xf]
    %v1777 = vld [vmem:[%s5 + $0x15c] sm:$0xf]
    %v1778 = vld [vmem:[%s5 + $0x160] sm:$0xf]
    %v1779 = vld [vmem:[%s5 + $0x164] sm:$0xf]
    %v1780 = vld [vmem:[%s5 + $0x168] sm:$0xf]
    %v1781 = vld [vmem:[%s5 + $0x16c] sm:$0xf]
    %v1782 = vld [vmem:[%s5 + $0x170] sm:$0xf]
    %v1783 = vld [vmem:[%s5 + $0x174] sm:$0xf]
    %v1784 = vld [vmem:[%s5 + $0x178] sm:$0xf]
    %v1785 = vld [vmem:[%s5 + $0x17c] sm:$0xf]
    %v1786 = vld [vmem:[%s5 + $0x180] sm:$0xf]
    %v1787 = vld [vmem:[%s5 + $0x184] sm:$0xf]
    %v1788 = vld [vmem:[%s5 + $0x188] sm:$0xf]
    %v1789 = vld [vmem:[%s5 + $0x18c] sm:$0xf]
    %v1790 = vld [vmem:[%s5 + $0x190] sm:$0xf]
    %v1791 = vld [vmem:[%s5 + $0x194] sm:$0xf]
    %v1792 = vld [vmem:[%s5 + $0x198] sm:$0xf]
    %v1793 = vld [vmem:[%s5 + $0x19c] sm:$0xf]
    %v1794 = vld [vmem:[%s5 + $0x1a0] sm:$0xf]
    %v1795 = vld [vmem:[%s5 + $0x1a4] sm:$0xf]
    %v1796 = vld [vmem:[%s5 + $0x1a8] sm:$0xf]
    %v1797 = vld [vmem:[%s5 + $0x1ac] sm:$0xf]
    %v1798 = vld [vmem:[%s5 + $0x1b0] sm:$0xf]
    %v1799 = vld [vmem:[%s5 + $0x1b4] sm:$0xf]
    %v1800 = vld [vmem:[%s5 + $0x1b8] sm:$0xf]
    %v1801 = vld [vmem:[%s5 + $0x1bc] sm:$0xf]
    %v1802 = vld [vmem:[%s5 + $0x1c0] sm:$0xf]
    %v1803 = vld [vmem:[%s5 + $0x1c4] sm:$0xf]
    %v1804 = vld [vmem:[%s5 + $0x1c8] sm:$0xf]
    %v1805 = vld [vmem:[%s5 + $0x1cc] sm:$0xf]
    %v1806 = vld [vmem:[%s5 + $0x1d0] sm:$0xf]
    %v1807 = vld [vmem:[%s5 + $0x1d4] sm:$0xf]
    %v1808 = vld [vmem:[%s5 + $0x1d8] sm:$0xf]
    %v1809 = vld [vmem:[%s5 + $0x1dc] sm:$0xf]
    %v1810 = vld [vmem:[%s5 + $0x1e0] sm:$0xf]
    %v1811 = vld [vmem:[%s5 + $0x1e4] sm:$0xf]
    %v1812 = vld [vmem:[%s5 + $0x1e8] sm:$0xf]
    %v1813 = vld [vmem:[%s5 + $0x1ec] sm:$0xf]
    %v1814 = vld [vmem:[%s5 + $0x1f0] sm:$0xf]
    %v1815 = vld [vmem:[%s5 + $0x1f4] sm:$0xf]
    %v1816 = vld [vmem:[%s5 + $0x1f8] sm:$0xf]
    %v1817 = vld [vmem:[%s5 + $0x1fc] sm:$0xf]
    %v1818 = vld [vmem:[%s5 + $0x200] sm:$0xf]
    %v1819 = vld [vmem:[%s5 + $0x204] sm:$0xf]
    %v1820 = vld [vmem:[%s5 + $0x208] sm:$0xf]
    %v1821 = vld [vmem:[%s5 + $0x20c] sm:$0xf]
    %v1822 = vld [vmem:[%s5 + $0x210] sm:$0xf]
    %v1823 = vld [vmem:[%s5 + $0x214] sm:$0xf]
    %v1824 = vld [vmem:[%s5 + $0x218] sm:$0xf]
    %v1825 = vld [vmem:[%s5 + $0x21c] sm:$0xf]
    %v1826 = vld [vmem:[%s5 + $0x220] sm:$0xf]
    %v1827 = vld [vmem:[%s5 + $0x224] sm:$0xf]
    %v1828 = vld [vmem:[%s5 + $0x228] sm:$0xf]
    %v1829 = vld [vmem:[%s5 + $0x22c] sm:$0xf]
    %v1830 = vld [vmem:[%s5 + $0x230] sm:$0xf]
    %v1831 = vld [vmem:[%s5 + $0x234] sm:$0xf]
    %v1832 = vld [vmem:[%s5 + $0x238] sm:$0xf]
    %v1833 = vld [vmem:[%s5 + $0x23c] sm:$0xf]
    %v1834 = vld [vmem:[%s5 + $0x240] sm:$0xf]
    %v1835 = vld [vmem:[%s5 + $0x244] sm:$0xf]
    %v1836 = vld [vmem:[%s5 + $0x248] sm:$0xf]
    %v1837 = vld [vmem:[%s5 + $0x24c] sm:$0xf]
    %v1838 = vld [vmem:[%s5 + $0x250] sm:$0xf]
    %v1839 = vld [vmem:[%s5 + $0x254] sm:$0xf]
    %v1840 = vld [vmem:[%s5 + $0x258] sm:$0xf]
    %v1841 = vld [vmem:[%s5 + $0x25c] sm:$0xf]
    %v1842 = vld [vmem:[%s5 + $0x260] sm:$0xf]
    %v1843 = vld [vmem:[%s5 + $0x264] sm:$0xf]
    %v1844 = vld [vmem:[%s5 + $0x268] sm:$0xf]
    %v1845 = vld [vmem:[%s5 + $0x26c] sm:$0xf]
    %v1846 = vld [vmem:[%s5 + $0x270] sm:$0xf]
    %v1847 = vld [vmem:[%s5 + $0x274] sm:$0xf]
    %v1848 = vld [vmem:[%s5 + $0x278] sm:$0xf]
    %v1849 = vld [vmem:[%s5 + $0x27c] sm:$0xf]
    %v1850 = vld [vmem:[%s5 + $0x280] sm:$0xf]
    %v1851 = vld [vmem:[%s5 + $0x284] sm:$0xf]
    %v1852 = vld [vmem:[%s5 + $0x288] sm:$0xf]
    %v1853 = vld [vmem:[%s5 + $0x28c] sm:$0xf]
    %v1854 = vld [vmem:[%s5 + $0x290] sm:$0xf]
    %v1855 = vld [vmem:[%s5 + $0x294] sm:$0xf]
    %v1856 = vld [vmem:[%s5 + $0x298] sm:$0xf]
    %v1857 = vld [vmem:[%s5 + $0x29c] sm:$0xf]
    %v1858 = vld [vmem:[%s5 + $0x2a0] sm:$0xf]
    %v1859 = vld [vmem:[%s5 + $0x2a4] sm:$0xf]
    %v1860 = vld [vmem:[%s5 + $0x2a8] sm:$0xf]
    %v1861 = vld [vmem:[%s5 + $0x2ac] sm:$0xf]
    %v1862 = vld [vmem:[%s5 + $0x2b0] sm:$0xf]
    %v1863 = vld [vmem:[%s5 + $0x2b4] sm:$0xf]
    %v1864 = vld [vmem:[%s5 + $0x2b8] sm:$0xf]
    %v1865 = vld [vmem:[%s5 + $0x2bc] sm:$0xf]
    %v1866 = vld [vmem:[%s5 + $0x2c0] sm:$0xf]
    %v1867 = vld [vmem:[%s5 + $0x2c4] sm:$0xf]
    %v1868 = vld [vmem:[%s5 + $0x2c8] sm:$0xf]
    %v1869 = vld [vmem:[%s5 + $0x2cc] sm:$0xf]
    %v1870 = vld [vmem:[%s5 + $0x2d0] sm:$0xf]
    %v1871 = vld [vmem:[%s5 + $0x2d4] sm:$0xf]
    %v1872 = vld [vmem:[%s5 + $0x2d8] sm:$0xf]
    %v1873 = vld [vmem:[%s5 + $0x2dc] sm:$0xf]
    %v1874 = vld [vmem:[%s5 + $0x2e0] sm:$0xf]
    %v1875 = vld [vmem:[%s5 + $0x2e4] sm:$0xf]
    %v1876 = vld [vmem:[%s5 + $0x2e8] sm:$0xf]
    %v1877 = vld [vmem:[%s5 + $0x2ec] sm:$0xf]
    %v1878 = vld [vmem:[%s5 + $0x2f0] sm:$0xf]
    %v1879 = vld [vmem:[%s5 + $0x2f4] sm:$0xf]
    %v1880 = vld [vmem:[%s5 + $0x2f8] sm:$0xf]
    %v1881 = vld [vmem:[%s5 + $0x2fc] sm:$0xf]
    %v1882 = vld [vmem:[%s5 + $0x300] sm:$0xf]
    %v1883 = vld [vmem:[%s5 + $0x304] sm:$0xf]
    %v1884 = vld [vmem:[%s5 + $0x308] sm:$0xf]
    %v1885 = vld [vmem:[%s5 + $0x30c] sm:$0xf]
    %v1886 = vld [vmem:[%s5 + $0x310] sm:$0xf]
    %v1887 = vld [vmem:[%s5 + $0x314] sm:$0xf]
    %v1888 = vld [vmem:[%s5 + $0x318] sm:$0xf]
    %v1889 = vld [vmem:[%s5 + $0x31c] sm:$0xf]
    %v1890 = vld [vmem:[%s5 + $0x320] sm:$0xf]
    %v1891 = vld [vmem:[%s5 + $0x324] sm:$0xf]
    %v1892 = vld [vmem:[%s5 + $0x328] sm:$0xf]
    %v1893 = vld [vmem:[%s5 + $0x32c] sm:$0xf]
    %v1894 = vld [vmem:[%s5 + $0x330] sm:$0xf]
    %v1895 = vld [vmem:[%s5 + $0x334] sm:$0xf]
    %v1896 = vld [vmem:[%s5 + $0x338] sm:$0xf]
    %v1897 = vld [vmem:[%s5 + $0x33c] sm:$0xf]
    %v1898 = vld [vmem:[%s5 + $0x340] sm:$0xf]
    %v1899 = vld [vmem:[%s5 + $0x344] sm:$0xf]
    %v1900 = vld [vmem:[%s5 + $0x348] sm:$0xf]
    %v1901 = vld [vmem:[%s5 + $0x34c] sm:$0xf]
    %v1902 = vld [vmem:[%s5 + $0x350] sm:$0xf]
    %v1903 = vld [vmem:[%s5 + $0x354] sm:$0xf]
    %v1904 = vld [vmem:[%s5 + $0x358] sm:$0xf]
    %v1905 = vld [vmem:[%s5 + $0x35c] sm:$0xf]
    %v1906 = vld [vmem:[%s5 + $0x360] sm:$0xf]
    %v1907 = vld [vmem:[%s5 + $0x364] sm:$0xf]
    %v1908 = vld [vmem:[%s5 + $0x368] sm:$0xf]
    %v1909 = vld [vmem:[%s5 + $0x36c] sm:$0xf]
    %v1910 = vld [vmem:[%s5 + $0x370] sm:$0xf]
    %v1911 = vld [vmem:[%s5 + $0x374] sm:$0xf]
    %v1912 = vld [vmem:[%s5 + $0x378] sm:$0xf]
    %v1913 = vld [vmem:[%s5 + $0x37c] sm:$0xf]
    %v1914 = vld [vmem:[%s5 + $0x380] sm:$0xf]
    %v1915 = vld [vmem:[%s5 + $0x384] sm:$0xf]
    %v1916 = vld [vmem:[%s5 + $0x388] sm:$0xf]
    %v1917 = vld [vmem:[%s5 + $0x38c] sm:$0xf]
    %v1918 = vld [vmem:[%s5 + $0x390] sm:$0xf]
    %v1919 = vld [vmem:[%s5 + $0x394] sm:$0xf]
    %v1920 = vld [vmem:[%s5 + $0x398] sm:$0xf]
    %v1921 = vld [vmem:[%s5 + $0x39c] sm:$0xf]
    %v1922 = vld [vmem:[%s5 + $0x3a0] sm:$0xf]
    %v1923 = vld [vmem:[%s5 + $0x3a4] sm:$0xf]
    %v1924 = vld [vmem:[%s5 + $0x3a8] sm:$0xf]
    %v1925 = vld [vmem:[%s5 + $0x3ac] sm:$0xf]
    %v1926 = vld [vmem:[%s5 + $0x3b0] sm:$0xf]
    %v1927 = vld [vmem:[%s5 + $0x3b4] sm:$0xf]
    %v1928 = vld [vmem:[%s5 + $0x3b8] sm:$0xf]
    %v1929 = vld [vmem:[%s5 + $0x3bc] sm:$0xf]
    %v1930 = vld [vmem:[%s5 + $0x3c0] sm:$0xf]
    %v1931 = vld [vmem:[%s5 + $0x3c4] sm:$0xf]
    %v1932 = vld [vmem:[%s5 + $0x3c8] sm:$0xf]
    %v1933 = vld [vmem:[%s5 + $0x3cc] sm:$0xf]
    %v1934 = vld [vmem:[%s5 + $0x3d0] sm:$0xf]
    %v1935 = vld [vmem:[%s5 + $0x3d4] sm:$0xf]
    %v1936 = vld [vmem:[%s5 + $0x3d8] sm:$0xf]
    %v1937 = vld [vmem:[%s5 + $0x3dc] sm:$0xf]
    %v1938 = vld [vmem:[%s5 + $0x3e0] sm:$0xf]
    %v1939 = vld [vmem:[%s5 + $0x3e4] sm:$0xf]
    %v1940 = vld [vmem:[%s5 + $0x3e8] sm:$0xf]
    %v1941 = vld [vmem:[%s5 + $0x3ec] sm:$0xf]
    %v1942 = vld [vmem:[%s5 + $0x3f0] sm:$0xf]
    %v1943 = vld [vmem:[%s5 + $0x3f4] sm:$0xf]
    %v1944 = vld [vmem:[%s5 + $0x3f8] sm:$0xf]
    %v1945 = vld [vmem:[%s5 + $0x3fc] sm:$0xf]
    %v1946 = vld [vmem:[%s6] sm:$0x1]
    %v1948 = vlaneseq
    %v1949 = vshrl.u32 %v1948, 7
    %v1950 = vsub.s32 0, %v1949
    %v1951 = vrot.slane %v1946, %v1950
    %v2209 = vunpack.c.l.b16 %v1690
    %v2210 = vunpack.c.l.b16 %v1691
    %v2211 = vunpack.c.l.b16 %v1692
    %v2212 = vunpack.c.l.b16 %v1693
    %v2213 = vunpack.c.l.b16 %v1694
    %v2214 = vunpack.c.l.b16 %v1695
    %v2215 = vunpack.c.l.b16 %v1696
    %v2216 = vunpack.c.l.b16 %v1697
    %v2217 = vunpack.c.l.b16 %v1698
    %v2218 = vunpack.c.l.b16 %v1699
    %v2219 = vunpack.c.l.b16 %v1700
    %v2220 = vunpack.c.l.b16 %v1701
    %v2221 = vunpack.c.l.b16 %v1702
    %v2222 = vunpack.c.l.b16 %v1703
    %v2223 = vunpack.c.l.b16 %v1704
    %v2224 = vunpack.c.l.b16 %v1705
    %v2225 = vunpack.c.l.b16 %v1706
    %v2226 = vunpack.c.l.b16 %v1707
    %v2227 = vunpack.c.l.b16 %v1708
    %v2228 = vunpack.c.l.b16 %v1709
    %v2229 = vunpack.c.l.b16 %v1710
    %v2230 = vunpack.c.l.b16 %v1711
    %v2231 = vunpack.c.l.b16 %v1712
    %v2232 = vunpack.c.l.b16 %v1713
    %v2233 = vunpack.c.l.b16 %v1714
    %v2234 = vunpack.c.l.b16 %v1715
    %v2235 = vunpack.c.l.b16 %v1716
    %v2236 = vunpack.c.l.b16 %v1717
    %v2237 = vunpack.c.l.b16 %v1718
    %v2238 = vunpack.c.l.b16 %v1719
    %v2239 = vunpack.c.l.b16 %v1720
    %v2240 = vunpack.c.l.b16 %v1721
    %v2241 = vunpack.c.l.b16 %v1722
    %v2242 = vunpack.c.l.b16 %v1723
    %v2243 = vunpack.c.l.b16 %v1724
    %v2244 = vunpack.c.l.b16 %v1725
    %v2245 = vunpack.c.l.b16 %v1726
    %v2246 = vunpack.c.l.b16 %v1727
    %v2247 = vunpack.c.l.b16 %v1728
    %v2248 = vunpack.c.l.b16 %v1729
    %v2249 = vunpack.c.l.b16 %v1730
    %v2250 = vunpack.c.l.b16 %v1731
    %v2251 = vunpack.c.l.b16 %v1732
    %v2252 = vunpack.c.l.b16 %v1733
    %v2253 = vunpack.c.l.b16 %v1734
    %v2254 = vunpack.c.l.b16 %v1735
    %v2255 = vunpack.c.l.b16 %v1736
    %v2256 = vunpack.c.l.b16 %v1737
    %v2257 = vunpack.c.l.b16 %v1738
    %v2258 = vunpack.c.l.b16 %v1739
    %v2259 = vunpack.c.l.b16 %v1740
    %v2260 = vunpack.c.l.b16 %v1741
    %v2261 = vunpack.c.l.b16 %v1742
    %v2262 = vunpack.c.l.b16 %v1743
    %v2263 = vunpack.c.l.b16 %v1744
    %v2264 = vunpack.c.l.b16 %v1745
    %v2265 = vunpack.c.l.b16 %v1746
    %v2266 = vunpack.c.l.b16 %v1747
    %v2267 = vunpack.c.l.b16 %v1748
    %v2268 = vunpack.c.l.b16 %v1749
    %v2269 = vunpack.c.l.b16 %v1750
    %v2270 = vunpack.c.l.b16 %v1751
    %v2271 = vunpack.c.l.b16 %v1752
    %v2272 = vunpack.c.l.b16 %v1753
    %v2273 = vunpack.c.l.b16 %v1754
    %v2274 = vunpack.c.l.b16 %v1755
    %v2275 = vunpack.c.l.b16 %v1756
    %v2276 = vunpack.c.l.b16 %v1757
    %v2277 = vunpack.c.l.b16 %v1758
    %v2278 = vunpack.c.l.b16 %v1759
    %v2279 = vunpack.c.l.b16 %v1760
    %v2280 = vunpack.c.l.b16 %v1761
    %v2281 = vunpack.c.l.b16 %v1762
    %v2282 = vunpack.c.l.b16 %v1763
    %v2283 = vunpack.c.l.b16 %v1764
    %v2284 = vunpack.c.l.b16 %v1765
    %v2285 = vunpack.c.l.b16 %v1766
    %v2286 = vunpack.c.l.b16 %v1767
    %v2287 = vunpack.c.l.b16 %v1768
    %v2288 = vunpack.c.l.b16 %v1769
    %v2289 = vunpack.c.l.b16 %v1770
    %v2290 = vunpack.c.l.b16 %v1771
    %v2291 = vunpack.c.l.b16 %v1772
    %v2292 = vunpack.c.l.b16 %v1773
    %v2293 = vunpack.c.l.b16 %v1774
    %v2294 = vunpack.c.l.b16 %v1775
    %v2295 = vunpack.c.l.b16 %v1776
    %v2296 = vunpack.c.l.b16 %v1777
    %v2297 = vunpack.c.l.b16 %v1778
    %v2298 = vunpack.c.l.b16 %v1779
    %v2299 = vunpack.c.l.b16 %v1780
    %v2300 = vunpack.c.l.b16 %v1781
    %v2301 = vunpack.c.l.b16 %v1782
    %v2302 = vunpack.c.l.b16 %v1783
    %v2303 = vunpack.c.l.b16 %v1784
    %v2304 = vunpack.c.l.b16 %v1785
    %v2305 = vunpack.c.l.b16 %v1786
    %v2306 = vunpack.c.l.b16 %v1787
    %v2307 = vunpack.c.l.b16 %v1788
    %v2308 = vunpack.c.l.b16 %v1789
    %v2309 = vunpack.c.l.b16 %v1790
    %v2310 = vunpack.c.l.b16 %v1791
    %v2311 = vunpack.c.l.b16 %v1792
    %v2312 = vunpack.c.l.b16 %v1793
    %v2313 = vunpack.c.l.b16 %v1794
    %v2314 = vunpack.c.l.b16 %v1795
    %v2315 = vunpack.c.l.b16 %v1796
    %v2316 = vunpack.c.l.b16 %v1797
    %v2317 = vunpack.c.l.b16 %v1798
    %v2318 = vunpack.c.l.b16 %v1799
    %v2319 = vunpack.c.l.b16 %v1800
    %v2320 = vunpack.c.l.b16 %v1801
    %v2321 = vunpack.c.l.b16 %v1802
    %v2322 = vunpack.c.l.b16 %v1803
    %v2323 = vunpack.c.l.b16 %v1804
    %v2324 = vunpack.c.l.b16 %v1805
    %v2325 = vunpack.c.l.b16 %v1806
    %v2326 = vunpack.c.l.b16 %v1807
    %v2327 = vunpack.c.l.b16 %v1808
    %v2328 = vunpack.c.l.b16 %v1809
    %v2329 = vunpack.c.l.b16 %v1810
    %v2330 = vunpack.c.l.b16 %v1811
    %v2331 = vunpack.c.l.b16 %v1812
    %v2332 = vunpack.c.l.b16 %v1813
    %v2333 = vunpack.c.l.b16 %v1814
    %v2334 = vunpack.c.l.b16 %v1815
    %v2335 = vunpack.c.l.b16 %v1816
    %v2336 = vunpack.c.l.b16 %v1817
    %v2337 = vunpack.c.l.b16 %v1818
    %v2338 = vunpack.c.l.b16 %v1819
    %v2339 = vunpack.c.l.b16 %v1820
    %v2340 = vunpack.c.l.b16 %v1821
    %v2341 = vunpack.c.l.b16 %v1822
    %v2342 = vunpack.c.l.b16 %v1823
    %v2343 = vunpack.c.l.b16 %v1824
    %v2344 = vunpack.c.l.b16 %v1825
    %v2345 = vunpack.c.l.b16 %v1826
    %v2346 = vunpack.c.l.b16 %v1827
    %v2347 = vunpack.c.l.b16 %v1828
    %v2348 = vunpack.c.l.b16 %v1829
    %v2349 = vunpack.c.l.b16 %v1830
    %v2350 = vunpack.c.l.b16 %v1831
    %v2351 = vunpack.c.l.b16 %v1832
    %v2352 = vunpack.c.l.b16 %v1833
    %v2353 = vunpack.c.l.b16 %v1834
    %v2354 = vunpack.c.l.b16 %v1835
    %v2355 = vunpack.c.l.b16 %v1836
    %v2356 = vunpack.c.l.b16 %v1837
    %v2357 = vunpack.c.l.b16 %v1838
    %v2358 = vunpack.c.l.b16 %v1839
    %v2359 = vunpack.c.l.b16 %v1840
    %v2360 = vunpack.c.l.b16 %v1841
    %v2361 = vunpack.c.l.b16 %v1842
    %v2362 = vunpack.c.l.b16 %v1843
    %v2363 = vunpack.c.l.b16 %v1844
    %v2364 = vunpack.c.l.b16 %v1845
    %v2365 = vunpack.c.l.b16 %v1846
    %v2366 = vunpack.c.l.b16 %v1847
    %v2367 = vunpack.c.l.b16 %v1848
    %v2368 = vunpack.c.l.b16 %v1849
    %v2369 = vunpack.c.l.b16 %v1850
    %v2370 = vunpack.c.l.b16 %v1851
    %v2371 = vunpack.c.l.b16 %v1852
    %v2372 = vunpack.c.l.b16 %v1853
    %v2373 = vunpack.c.l.b16 %v1854
    %v2374 = vunpack.c.l.b16 %v1855
    %v2375 = vunpack.c.l.b16 %v1856
    %v2376 = vunpack.c.l.b16 %v1857
    %v2377 = vunpack.c.l.b16 %v1858
    %v2378 = vunpack.c.l.b16 %v1859
    %v2379 = vunpack.c.l.b16 %v1860
    %v2380 = vunpack.c.l.b16 %v1861
    %v2381 = vunpack.c.l.b16 %v1862
    %v2382 = vunpack.c.l.b16 %v1863
    %v2383 = vunpack.c.l.b16 %v1864
    %v2384 = vunpack.c.l.b16 %v1865
    %v2385 = vunpack.c.l.b16 %v1866
    %v2386 = vunpack.c.l.b16 %v1867
    %v2387 = vunpack.c.l.b16 %v1868
    %v2388 = vunpack.c.l.b16 %v1869
    %v2389 = vunpack.c.l.b16 %v1870
    %v2390 = vunpack.c.l.b16 %v1871
    %v2391 = vunpack.c.l.b16 %v1872
    %v2392 = vunpack.c.l.b16 %v1873
    %v2393 = vunpack.c.l.b16 %v1874
    %v2394 = vunpack.c.l.b16 %v1875
    %v2395 = vunpack.c.l.b16 %v1876
    %v2396 = vunpack.c.l.b16 %v1877
    %v2397 = vunpack.c.l.b16 %v1878
    %v2398 = vunpack.c.l.b16 %v1879
    %v2399 = vunpack.c.l.b16 %v1880
    %v2400 = vunpack.c.l.b16 %v1881
    %v2401 = vunpack.c.l.b16 %v1882
    %v2402 = vunpack.c.l.b16 %v1883
    %v2403 = vunpack.c.l.b16 %v1884
    %v2404 = vunpack.c.l.b16 %v1885
    %v2405 = vunpack.c.l.b16 %v1886
    %v2406 = vunpack.c.l.b16 %v1887
    %v2407 = vunpack.c.l.b16 %v1888
    %v2408 = vunpack.c.l.b16 %v1889
    %v2409 = vunpack.c.l.b16 %v1890
    %v2410 = vunpack.c.l.b16 %v1891
    %v2411 = vunpack.c.l.b16 %v1892
    %v2412 = vunpack.c.l.b16 %v1893
    %v2413 = vunpack.c.l.b16 %v1894
    %v2414 = vunpack.c.l.b16 %v1895
    %v2415 = vunpack.c.l.b16 %v1896
    %v2416 = vunpack.c.l.b16 %v1897
    %v2417 = vunpack.c.l.b16 %v1898
    %v2418 = vunpack.c.l.b16 %v1899
    %v2419 = vunpack.c.l.b16 %v1900
    %v2420 = vunpack.c.l.b16 %v1901
    %v2421 = vunpack.c.l.b16 %v1902
    %v2422 = vunpack.c.l.b16 %v1903
    %v2423 = vunpack.c.l.b16 %v1904
    %v2424 = vunpack.c.l.b16 %v1905
    %v2425 = vunpack.c.l.b16 %v1906
    %v2426 = vunpack.c.l.b16 %v1907
    %v2427 = vunpack.c.l.b16 %v1908
    %v2428 = vunpack.c.l.b16 %v1909
    %v2429 = vunpack.c.l.b16 %v1910
    %v2430 = vunpack.c.l.b16 %v1911
    %v2431 = vunpack.c.l.b16 %v1912
    %v2432 = vunpack.c.l.b16 %v1913
    %v2433 = vunpack.c.l.b16 %v1914
    %v2434 = vunpack.c.l.b16 %v1915
    %v2435 = vunpack.c.l.b16 %v1916
    %v2436 = vunpack.c.l.b16 %v1917
    %v2437 = vunpack.c.l.b16 %v1918
    %v2438 = vunpack.c.l.b16 %v1919
    %v2439 = vunpack.c.l.b16 %v1920
    %v2440 = vunpack.c.l.b16 %v1921
    %v2441 = vunpack.c.l.b16 %v1922
    %v2442 = vunpack.c.l.b16 %v1923
    %v2443 = vunpack.c.l.b16 %v1924
    %v2444 = vunpack.c.l.b16 %v1925
    %v2445 = vunpack.c.l.b16 %v1926
    %v2446 = vunpack.c.l.b16 %v1927
    %v2447 = vunpack.c.l.b16 %v1928
    %v2448 = vunpack.c.l.b16 %v1929
    %v2449 = vunpack.c.l.b16 %v1930
    %v2450 = vunpack.c.l.b16 %v1931
    %v2451 = vunpack.c.l.b16 %v1932
    %v2452 = vunpack.c.l.b16 %v1933
    %v2453 = vunpack.c.l.b16 %v1934
    %v2454 = vunpack.c.l.b16 %v1935
    %v2455 = vunpack.c.l.b16 %v1936
    %v2456 = vunpack.c.l.b16 %v1937
    %v2457 = vunpack.c.l.b16 %v1938
    %v2458 = vunpack.c.l.b16 %v1939
    %v2459 = vunpack.c.l.b16 %v1940
    %v2460 = vunpack.c.l.b16 %v1941
    %v2461 = vunpack.c.l.b16 %v1942
    %v2462 = vunpack.c.l.b16 %v1943
    %v2463 = vunpack.c.l.b16 %v1944
    %v2464 = vunpack.c.l.b16 %v1945
    %v2465 = vpack.c.b16 %v2210, %v2209
    %v2466 = vpack.c.b16 %v2212, %v2211
    %v2467 = vpack.c.b16 %v2214, %v2213
    %v2468 = vpack.c.b16 %v2216, %v2215
    %v2469 = vpack.c.b16 %v2218, %v2217
    %v2470 = vpack.c.b16 %v2220, %v2219
    %v2471 = vpack.c.b16 %v2222, %v2221
    %v2472 = vpack.c.b16 %v2224, %v2223
    %v2473 = vpack.c.b16 %v2226, %v2225
    %v2474 = vpack.c.b16 %v2228, %v2227
    %v2475 = vpack.c.b16 %v2230, %v2229
    %v2476 = vpack.c.b16 %v2232, %v2231
    %v2477 = vpack.c.b16 %v2234, %v2233
    %v2478 = vpack.c.b16 %v2236, %v2235
    %v2479 = vpack.c.b16 %v2238, %v2237
    %v2480 = vpack.c.b16 %v2240, %v2239
    %v2481 = vpack.c.b16 %v2242, %v2241
    %v2482 = vpack.c.b16 %v2244, %v2243
    %v2483 = vpack.c.b16 %v2246, %v2245
    %v2484 = vpack.c.b16 %v2248, %v2247
    %v2485 = vpack.c.b16 %v2250, %v2249
    %v2486 = vpack.c.b16 %v2252, %v2251
    %v2487 = vpack.c.b16 %v2254, %v2253
    %v2488 = vpack.c.b16 %v2256, %v2255
    %v2489 = vpack.c.b16 %v2258, %v2257
    %v2490 = vpack.c.b16 %v2260, %v2259
    %v2491 = vpack.c.b16 %v2262, %v2261
    %v2492 = vpack.c.b16 %v2264, %v2263
    %v2493 = vpack.c.b16 %v2266, %v2265
    %v2494 = vpack.c.b16 %v2268, %v2267
    %v2495 = vpack.c.b16 %v2270, %v2269
    %v2496 = vpack.c.b16 %v2272, %v2271
    %v2497 = vpack.c.b16 %v2274, %v2273
    %v2498 = vpack.c.b16 %v2276, %v2275
    %v2499 = vpack.c.b16 %v2278, %v2277
    %v2500 = vpack.c.b16 %v2280, %v2279
    %v2501 = vpack.c.b16 %v2282, %v2281
    %v2502 = vpack.c.b16 %v2284, %v2283
    %v2503 = vpack.c.b16 %v2286, %v2285
    %v2504 = vpack.c.b16 %v2288, %v2287
    %v2505 = vpack.c.b16 %v2290, %v2289
    %v2506 = vpack.c.b16 %v2292, %v2291
    %v2507 = vpack.c.b16 %v2294, %v2293
    %v2508 = vpack.c.b16 %v2296, %v2295
    %v2509 = vpack.c.b16 %v2298, %v2297
    %v2510 = vpack.c.b16 %v2300, %v2299
    %v2511 = vpack.c.b16 %v2302, %v2301
    %v2512 = vpack.c.b16 %v2304, %v2303
    %v2513 = vpack.c.b16 %v2306, %v2305
    %v2514 = vpack.c.b16 %v2308, %v2307
    %v2515 = vpack.c.b16 %v2310, %v2309
    %v2516 = vpack.c.b16 %v2312, %v2311
    %v2517 = vpack.c.b16 %v2314, %v2313
    %v2518 = vpack.c.b16 %v2316, %v2315
    %v2519 = vpack.c.b16 %v2318, %v2317
    %v2520 = vpack.c.b16 %v2320, %v2319
    %v2521 = vpack.c.b16 %v2322, %v2321
    %v2522 = vpack.c.b16 %v2324, %v2323
    %v2523 = vpack.c.b16 %v2326, %v2325
    %v2524 = vpack.c.b16 %v2328, %v2327
    %v2525 = vpack.c.b16 %v2330, %v2329
    %v2526 = vpack.c.b16 %v2332, %v2331
    %v2527 = vpack.c.b16 %v2334, %v2333
    %v2528 = vpack.c.b16 %v2336, %v2335
    %v2529 = vpack.c.b16 %v2338, %v2337
    %v2530 = vpack.c.b16 %v2340, %v2339
    %v2531 = vpack.c.b16 %v2342, %v2341
    %v2532 = vpack.c.b16 %v2344, %v2343
    %v2533 = vpack.c.b16 %v2346, %v2345
    %v2534 = vpack.c.b16 %v2348, %v2347
    %v2535 = vpack.c.b16 %v2350, %v2349
    %v2536 = vpack.c.b16 %v2352, %v2351
    %v2537 = vpack.c.b16 %v2354, %v2353
    %v2538 = vpack.c.b16 %v2356, %v2355
    %v2539 = vpack.c.b16 %v2358, %v2357
    %v2540 = vpack.c.b16 %v2360, %v2359
    %v2541 = vpack.c.b16 %v2362, %v2361
    %v2542 = vpack.c.b16 %v2364, %v2363
    %v2543 = vpack.c.b16 %v2366, %v2365
    %v2544 = vpack.c.b16 %v2368, %v2367
    %v2545 = vpack.c.b16 %v2370, %v2369
    %v2546 = vpack.c.b16 %v2372, %v2371
    %v2547 = vpack.c.b16 %v2374, %v2373
    %v2548 = vpack.c.b16 %v2376, %v2375
    %v2549 = vpack.c.b16 %v2378, %v2377
    %v2550 = vpack.c.b16 %v2380, %v2379
    %v2551 = vpack.c.b16 %v2382, %v2381
    %v2552 = vpack.c.b16 %v2384, %v2383
    %v2553 = vpack.c.b16 %v2386, %v2385
    %v2554 = vpack.c.b16 %v2388, %v2387
    %v2555 = vpack.c.b16 %v2390, %v2389
    %v2556 = vpack.c.b16 %v2392, %v2391
    %v2557 = vpack.c.b16 %v2394, %v2393
    %v2558 = vpack.c.b16 %v2396, %v2395
    %v2559 = vpack.c.b16 %v2398, %v2397
    %v2560 = vpack.c.b16 %v2400, %v2399
    %v2561 = vpack.c.b16 %v2402, %v2401
    %v2562 = vpack.c.b16 %v2404, %v2403
    %v2563 = vpack.c.b16 %v2406, %v2405
    %v2564 = vpack.c.b16 %v2408, %v2407
    %v2565 = vpack.c.b16 %v2410, %v2409
    %v2566 = vpack.c.b16 %v2412, %v2411
    %v2567 = vpack.c.b16 %v2414, %v2413
    %v2568 = vpack.c.b16 %v2416, %v2415
    %v2569 = vpack.c.b16 %v2418, %v2417
    %v2570 = vpack.c.b16 %v2420, %v2419
    %v2571 = vpack.c.b16 %v2422, %v2421
    %v2572 = vpack.c.b16 %v2424, %v2423
    %v2573 = vpack.c.b16 %v2426, %v2425
    %v2574 = vpack.c.b16 %v2428, %v2427
    %v2575 = vpack.c.b16 %v2430, %v2429
    %v2576 = vpack.c.b16 %v2432, %v2431
    %v2577 = vpack.c.b16 %v2434, %v2433
    %v2578 = vpack.c.b16 %v2436, %v2435
    %v2579 = vpack.c.b16 %v2438, %v2437
    %v2580 = vpack.c.b16 %v2440, %v2439
    %v2581 = vpack.c.b16 %v2442, %v2441
    %v2582 = vpack.c.b16 %v2444, %v2443
    %v2583 = vpack.c.b16 %v2446, %v2445
    %v2584 = vpack.c.b16 %v2448, %v2447
    %v2585 = vpack.c.b16 %v2450, %v2449
    %v2586 = vpack.c.b16 %v2452, %v2451
    %v2587 = vpack.c.b16 %v2454, %v2453
    %v2588 = vpack.c.b16 %v2456, %v2455
    %v2589 = vpack.c.b16 %v2458, %v2457
    %v2590 = vpack.c.b16 %v2460, %v2459
    %v2591 = vpack.c.b16 %v2462, %v2461
    %v2592 = vpack.c.b16 %v2464, %v2463
    %2721 = vmatprep.subr.bf16.mxu0 0
    %2722 = vmatpush1.bf16.msra.mxu0 %v2465
    %2723 = vmatprep.subr.bf16.mxu0 0
    %2724 = vmatpush1.bf16.msra.mxu0 %v2466
    %2725 = vmatprep.subr.bf16.mxu0 0
    %2726 = vmatpush1.bf16.msra.mxu0 %v2467
    %2727 = vmatprep.subr.bf16.mxu0 0
    %2728 = vmatpush1.bf16.msra.mxu0 %v2468
    %2729 = vmatprep.subr.bf16.mxu0 0
    %2730 = vmatpush1.bf16.msra.mxu0 %v2469
    %2731 = vmatprep.subr.bf16.mxu0 0
    %2732 = vmatpush1.bf16.msra.mxu0 %v2470
    %2733 = vmatprep.subr.bf16.mxu0 0
    %2734 = vmatpush1.bf16.msra.mxu0 %v2471
    %2735 = vmatprep.subr.bf16.mxu0 0
    %2736 = vmatpush1.bf16.msra.mxu0 %v2472
    %2737 = vmatprep.subr.bf16.mxu0 0
    %2738 = vmatpush1.bf16.msra.mxu0 %v2473
    %2739 = vmatprep.subr.bf16.mxu0 0
    %2740 = vmatpush1.bf16.msra.mxu0 %v2474
    %2741 = vmatprep.subr.bf16.mxu0 0
    %2742 = vmatpush1.bf16.msra.mxu0 %v2475
    %2743 = vmatprep.subr.bf16.mxu0 0
    %2744 = vmatpush1.bf16.msra.mxu0 %v2476
    %2745 = vmatprep.subr.bf16.mxu0 0
    %2746 = vmatpush1.bf16.msra.mxu0 %v2477
    %2747 = vmatprep.subr.bf16.mxu0 0
    %2748 = vmatpush1.bf16.msra.mxu0 %v2478
    %2749 = vmatprep.subr.bf16.mxu0 0
    %2750 = vmatpush1.bf16.msra.mxu0 %v2479
    %2751 = vmatprep.subr.bf16.mxu0 0
    %2752 = vmatpush1.bf16.msra.mxu0 %v2480
    %2753 = vmatprep.mubr.bf16.mxu0 %v1675
    %2754 = vmatmul.mubr.bf16.gmra.mrb[0].mxu0 %v1674
    %v2755 = vpop.f32.mrb[0].mxu0
    %v2756 = vadd.f32 %v1951, %v2755
    %v2757 = vpop.f32.mrb[0].mxu0
    %v2758 = vpop.f32.mrb[0].mxu0
    %v2759 = vpop.f32.mrb[0].mxu0
    %2760 = vdwg.mxu0
    %2761 = vmatprep.subr.bf16.mxu0 0
    %2762 = vmatpush1.bf16.msra.mxu0 %v2481
    %2763 = vmatprep.subr.bf16.mxu0 0
    %2764 = vmatpush1.bf16.msra.mxu0 %v2482
    %2765 = vmatprep.subr.bf16.mxu0 0
    %2766 = vmatpush1.bf16.msra.mxu0 %v2483
    %2767 = vmatprep.subr.bf16.mxu0 0
    %2768 = vmatpush1.bf16.msra.mxu0 %v2484
    %2769 = vmatprep.subr.bf16.mxu0 0
    %2770 = vmatpush1.bf16.msra.mxu0 %v2485
    %2771 = vmatprep.subr.bf16.mxu0 0
    %2772 = vmatpush1.bf16.msra.mxu0 %v2486
    %2773 = vmatprep.subr.bf16.mxu0 0
    %2774 = vmatpush1.bf16.msra.mxu0 %v2487
    %2775 = vmatprep.subr.bf16.mxu0 0
    %2776 = vmatpush1.bf16.msra.mxu0 %v2488
    %2777 = vmatprep.subr.bf16.mxu0 0
    %2778 = vmatpush1.bf16.msra.mxu0 %v2489
    %2779 = vmatprep.subr.bf16.mxu0 0
    %2780 = vmatpush1.bf16.msra.mxu0 %v2490
    %2781 = vmatprep.subr.bf16.mxu0 0
    %2782 = vmatpush1.bf16.msra.mxu0 %v2491
    %2783 = vmatprep.subr.bf16.mxu0 0
    %2784 = vmatpush1.bf16.msra.mxu0 %v2492
    %2785 = vmatprep.subr.bf16.mxu0 0
    %2786 = vmatpush1.bf16.msra.mxu0 %v2493
    %2787 = vmatprep.subr.bf16.mxu0 0
    %2788 = vmatpush1.bf16.msra.mxu0 %v2494
    %2789 = vmatprep.subr.bf16.mxu0 0
    %2790 = vmatpush1.bf16.msra.mxu0 %v2495
    %2791 = vmatprep.subr.bf16.mxu0 0
    %2792 = vmatpush1.bf16.msra.mxu0 %v2496
    %2793 = vmatprep.mubr.bf16.mxu0 %v1677
    %2794 = vmatmul.mubr.bf16.gmra.mrb[0].mxu0 %v1676
    %v2795 = vpop.f32.mrb[0].mxu0
    %v2796 = vadd.f32 %v2756, %v2795
    %v2797 = vpop.f32.mrb[0].mxu0
    %v2798 = vpop.f32.mrb[0].mxu0
    %v2799 = vpop.f32.mrb[0].mxu0
    %2800 = vdwg.mxu0
    %2801 = vmatprep.subr.bf16.mxu0 0
    %2802 = vmatpush1.bf16.msra.mxu0 %v2497
    %2803 = vmatprep.subr.bf16.mxu0 0
    %2804 = vmatpush1.bf16.msra.mxu0 %v2498
    %2805 = vmatprep.subr.bf16.mxu0 0
    %2806 = vmatpush1.bf16.msra.mxu0 %v2499
    %2807 = vmatprep.subr.bf16.mxu0 0
    %2808 = vmatpush1.bf16.msra.mxu0 %v2500
    %2809 = vmatprep.subr.bf16.mxu0 0
    %2810 = vmatpush1.bf16.msra.mxu0 %v2501
    %2811 = vmatprep.subr.bf16.mxu0 0
    %2812 = vmatpush1.bf16.msra.mxu0 %v2502
    %2813 = vmatprep.subr.bf16.mxu0 0
    %2814 = vmatpush1.bf16.msra.mxu0 %v2503
    %2815 = vmatprep.subr.bf16.mxu0 0
    %2816 = vmatpush1.bf16.msra.mxu0 %v2504
    %2817 = vmatprep.subr.bf16.mxu0 0
    %2818 = vmatpush1.bf16.msra.mxu0 %v2505
    %2819 = vmatprep.subr.bf16.mxu0 0
    %2820 = vmatpush1.bf16.msra.mxu0 %v2506
    %2821 = vmatprep.subr.bf16.mxu0 0
    %2822 = vmatpush1.bf16.msra.mxu0 %v2507
    %2823 = vmatprep.subr.bf16.mxu0 0
    %2824 = vmatpush1.bf16.msra.mxu0 %v2508
    %2825 = vmatprep.subr.bf16.mxu0 0
    %2826 = vmatpush1.bf16.msra.mxu0 %v2509
    %2827 = vmatprep.subr.bf16.mxu0 0
    %2828 = vmatpush1.bf16.msra.mxu0 %v2510
    %2829 = vmatprep.subr.bf16.mxu0 0
    %2830 = vmatpush1.bf16.msra.mxu0 %v2511
    %2831 = vmatprep.subr.bf16.mxu0 0
    %2832 = vmatpush1.bf16.msra.mxu0 %v2512
    %2833 = vmatprep.mubr.bf16.mxu0 %v1679
    %2834 = vmatmul.mubr.bf16.gmra.mrb[0].mxu0 %v1678
    %v2835 = vpop.f32.mrb[0].mxu0
    %v2836 = vadd.f32 %v2796, %v2835
    %v2837 = vpop.f32.mrb[0].mxu0
    %v2838 = vpop.f32.mrb[0].mxu0
    %v2839 = vpop.f32.mrb[0].mxu0
    %2840 = vdwg.mxu0
    %2841 = vmatprep.subr.bf16.mxu0 0
    %2842 = vmatpush1.bf16.msra.mxu0 %v2513
    %2843 = vmatprep.subr.bf16.mxu0 0
    %2844 = vmatpush1.bf16.msra.mxu0 %v2514
    %2845 = vmatprep.subr.bf16.mxu0 0
    %2846 = vmatpush1.bf16.msra.mxu0 %v2515
    %2847 = vmatprep.subr.bf16.mxu0 0
    %2848 = vmatpush1.bf16.msra.mxu0 %v2516
    %2849 = vmatprep.subr.bf16.mxu0 0
    %2850 = vmatpush1.bf16.msra.mxu0 %v2517
    %2851 = vmatprep.subr.bf16.mxu0 0
    %2852 = vmatpush1.bf16.msra.mxu0 %v2518
    %2853 = vmatprep.subr.bf16.mxu0 0
    %2854 = vmatpush1.bf16.msra.mxu0 %v2519
    %2855 = vmatprep.subr.bf16.mxu0 0
    %2856 = vmatpush1.bf16.msra.mxu0 %v2520
    %2857 = vmatprep.subr.bf16.mxu0 0
    %2858 = vmatpush1.bf16.msra.mxu0 %v2521
    %2859 = vmatprep.subr.bf16.mxu0 0
    %2860 = vmatpush1.bf16.msra.mxu0 %v2522
    %2861 = vmatprep.subr.bf16.mxu0 0
    %2862 = vmatpush1.bf16.msra.mxu0 %v2523
    %2863 = vmatprep.subr.bf16.mxu0 0
    %2864 = vmatpush1.bf16.msra.mxu0 %v2524
    %2865 = vmatprep.subr.bf16.mxu0 0
    %2866 = vmatpush1.bf16.msra.mxu0 %v2525
    %2867 = vmatprep.subr.bf16.mxu0 0
    %2868 = vmatpush1.bf16.msra.mxu0 %v2526
    %2869 = vmatprep.subr.bf16.mxu0 0
    %2870 = vmatpush1.bf16.msra.mxu0 %v2527
    %2871 = vmatprep.subr.bf16.mxu0 0
    %2872 = vmatpush1.bf16.msra.mxu0 %v2528
    %2873 = vmatprep.mubr.bf16.mxu0 %v1681
    %2874 = vmatmul.mubr.bf16.gmra.mrb[0].mxu0 %v1680
    %v2875 = vpop.f32.mrb[0].mxu0
    %v2876 = vadd.f32 %v2836, %v2875
    %v2877 = vpop.f32.mrb[0].mxu0
    %v2878 = vpop.f32.mrb[0].mxu0
    %v2879 = vpop.f32.mrb[0].mxu0
    %2880 = vdwg.mxu0
    %2881 = vmatprep.subr.bf16.mxu0 0
    %2882 = vmatpush1.bf16.msra.mxu0 %v2529
    %2883 = vmatprep.subr.bf16.mxu0 0
    %2884 = vmatpush1.bf16.msra.mxu0 %v2530
    %2885 = vmatprep.subr.bf16.mxu0 0
    %2886 = vmatpush1.bf16.msra.mxu0 %v2531
    %2887 = vmatprep.subr.bf16.mxu0 0
    %2888 = vmatpush1.bf16.msra.mxu0 %v2532
    %2889 = vmatprep.subr.bf16.mxu0 0
    %2890 = vmatpush1.bf16.msra.mxu0 %v2533
    %2891 = vmatprep.subr.bf16.mxu0 0
    %2892 = vmatpush1.bf16.msra.mxu0 %v2534
    %2893 = vmatprep.subr.bf16.mxu0 0
    %2894 = vmatpush1.bf16.msra.mxu0 %v2535
    %2895 = vmatprep.subr.bf16.mxu0 0
    %2896 = vmatpush1.bf16.msra.mxu0 %v2536
    %2897 = vmatprep.subr.bf16.mxu0 0
    %2898 = vmatpush1.bf16.msra.mxu0 %v2537
    %2899 = vmatprep.subr.bf16.mxu0 0
    %2900 = vmatpush1.bf16.msra.mxu0 %v2538
    %2901 = vmatprep.subr.bf16.mxu0 0
    %2902 = vmatpush1.bf16.msra.mxu0 %v2539
    %2903 = vmatprep.subr.bf16.mxu0 0
    %2904 = vmatpush1.bf16.msra.mxu0 %v2540
    %2905 = vmatprep.subr.bf16.mxu0 0
    %2906 = vmatpush1.bf16.msra.mxu0 %v2541
    %2907 = vmatprep.subr.bf16.mxu0 0
    %2908 = vmatpush1.bf16.msra.mxu0 %v2542
    %2909 = vmatprep.subr.bf16.mxu0 0
    %2910 = vmatpush1.bf16.msra.mxu0 %v2543
    %2911 = vmatprep.subr.bf16.mxu0 0
    %2912 = vmatpush1.bf16.msra.mxu0 %v2544
    %2913 = vmatprep.mubr.bf16.mxu0 %v1683
    %2914 = vmatmul.mubr.bf16.gmra.mrb[0].mxu0 %v1682
    %v2915 = vpop.f32.mrb[0].mxu0
    %v2916 = vadd.f32 %v2876, %v2915
    %v2917 = vpop.f32.mrb[0].mxu0
    %v2918 = vpop.f32.mrb[0].mxu0
    %v2919 = vpop.f32.mrb[0].mxu0
    %2920 = vdwg.mxu0
    %2921 = vmatprep.subr.bf16.mxu0 0
    %2922 = vmatpush1.bf16.msra.mxu0 %v2545
    %2923 = vmatprep.subr.bf16.mxu0 0
    %2924 = vmatpush1.bf16.msra.mxu0 %v2546
    %2925 = vmatprep.subr.bf16.mxu0 0
    %2926 = vmatpush1.bf16.msra.mxu0 %v2547
    %2927 = vmatprep.subr.bf16.mxu0 0
    %2928 = vmatpush1.bf16.msra.mxu0 %v2548
    %2929 = vmatprep.subr.bf16.mxu0 0
    %2930 = vmatpush1.bf16.msra.mxu0 %v2549
    %2931 = vmatprep.subr.bf16.mxu0 0
    %2932 = vmatpush1.bf16.msra.mxu0 %v2550
    %2933 = vmatprep.subr.bf16.mxu0 0
    %2934 = vmatpush1.bf16.msra.mxu0 %v2551
    %2935 = vmatprep.subr.bf16.mxu0 0
    %2936 = vmatpush1.bf16.msra.mxu0 %v2552
    %2937 = vmatprep.subr.bf16.mxu0 0
    %2938 = vmatpush1.bf16.msra.mxu0 %v2553
    %2939 = vmatprep.subr.bf16.mxu0 0
    %2940 = vmatpush1.bf16.msra.mxu0 %v2554
    %2941 = vmatprep.subr.bf16.mxu0 0
    %2942 = vmatpush1.bf16.msra.mxu0 %v2555
    %2943 = vmatprep.subr.bf16.mxu0 0
    %2944 = vmatpush1.bf16.msra.mxu0 %v2556
    %2945 = vmatprep.subr.bf16.mxu0 0
    %2946 = vmatpush1.bf16.msra.mxu0 %v2557
    %2947 = vmatprep.subr.bf16.mxu0 0
    %2948 = vmatpush1.bf16.msra.mxu0 %v2558
    %2949 = vmatprep.subr.bf16.mxu0 0
    %2950 = vmatpush1.bf16.msra.mxu0 %v2559
    %2951 = vmatprep.subr.bf16.mxu0 0
    %2952 = vmatpush1.bf16.msra.mxu0 %v2560
    %2953 = vmatprep.mubr.bf16.mxu0 %v1685
    %2954 = vmatmul.mubr.bf16.gmra.mrb[0].mxu0 %v1684
    %v2955 = vpop.f32.mrb[0].mxu0
    %v2956 = vadd.f32 %v2916, %v2955
    %v2957 = vpop.f32.mrb[0].mxu0
    %v2958 = vpop.f32.mrb[0].mxu0
    %v2959 = vpop.f32.mrb[0].mxu0
    %2960 = vdwg.mxu0
    %2961 = vmatprep.subr.bf16.mxu0 0
    %2962 = vmatpush1.bf16.msra.mxu0 %v2561
    %2963 = vmatprep.subr.bf16.mxu0 0
    %2964 = vmatpush1.bf16.msra.mxu0 %v2562
    %2965 = vmatprep.subr.bf16.mxu0 0
    %2966 = vmatpush1.bf16.msra.mxu0 %v2563
    %2967 = vmatprep.subr.bf16.mxu0 0
    %2968 = vmatpush1.bf16.msra.mxu0 %v2564
    %2969 = vmatprep.subr.bf16.mxu0 0
    %2970 = vmatpush1.bf16.msra.mxu0 %v2565
    %2971 = vmatprep.subr.bf16.mxu0 0
    %2972 = vmatpush1.bf16.msra.mxu0 %v2566
    %2973 = vmatprep.subr.bf16.mxu0 0
    %2974 = vmatpush1.bf16.msra.mxu0 %v2567
    %2975 = vmatprep.subr.bf16.mxu0 0
    %2976 = vmatpush1.bf16.msra.mxu0 %v2568
    %2977 = vmatprep.subr.bf16.mxu0 0
    %2978 = vmatpush1.bf16.msra.mxu0 %v2569
    %2979 = vmatprep.subr.bf16.mxu0 0
    %2980 = vmatpush1.bf16.msra.mxu0 %v2570
    %2981 = vmatprep.subr.bf16.mxu0 0
    %2982 = vmatpush1.bf16.msra.mxu0 %v2571
    %2983 = vmatprep.subr.bf16.mxu0 0
    %2984 = vmatpush1.bf16.msra.mxu0 %v2572
    %2985 = vmatprep.subr.bf16.mxu0 0
    %2986 = vmatpush1.bf16.msra.mxu0 %v2573
    %2987 = vmatprep.subr.bf16.mxu0 0
    %2988 = vmatpush1.bf16.msra.mxu0 %v2574
    %2989 = vmatprep.subr.bf16.mxu0 0
    %2990 = vmatpush1.bf16.msra.mxu0 %v2575
    %2991 = vmatprep.subr.bf16.mxu0 0
    %2992 = vmatpush1.bf16.msra.mxu0 %v2576
    %2993 = vmatprep.mubr.bf16.mxu0 %v1687
    %2994 = vmatmul.mubr.bf16.gmra.mrb[0].mxu0 %v1686
    %v2995 = vpop.f32.mrb[0].mxu0
    %v2996 = vadd.f32 %v2956, %v2995
    %v2997 = vpop.f32.mrb[0].mxu0
    %v2998 = vpop.f32.mrb[0].mxu0
    %v2999 = vpop.f32.mrb[0].mxu0
    %3000 = vdwg.mxu0
    %3001 = vmatprep.subr.bf16.mxu0 0
    %3002 = vmatpush1.bf16.msra.mxu0 %v2577
    %3003 = vmatprep.subr.bf16.mxu0 0
    %3004 = vmatpush1.bf16.msra.mxu0 %v2578
    %3005 = vmatprep.subr.bf16.mxu0 0
    %3006 = vmatpush1.bf16.msra.mxu0 %v2579
    %3007 = vmatprep.subr.bf16.mxu0 0
    %3008 = vmatpush1.bf16.msra.mxu0 %v2580
    %3009 = vmatprep.subr.bf16.mxu0 0
    %3010 = vmatpush1.bf16.msra.mxu0 %v2581
    %3011 = vmatprep.subr.bf16.mxu0 0
    %3012 = vmatpush1.bf16.msra.mxu0 %v2582
    %3013 = vmatprep.subr.bf16.mxu0 0
    %3014 = vmatpush1.bf16.msra.mxu0 %v2583
    %3015 = vmatprep.subr.bf16.mxu0 0
    %3016 = vmatpush1.bf16.msra.mxu0 %v2584
    %3017 = vmatprep.subr.bf16.mxu0 0
    %3018 = vmatpush1.bf16.msra.mxu0 %v2585
    %3019 = vmatprep.subr.bf16.mxu0 0
    %3020 = vmatpush1.bf16.msra.mxu0 %v2586
    %3021 = vmatprep.subr.bf16.mxu0 0
    %3022 = vmatpush1.bf16.msra.mxu0 %v2587
    %3023 = vmatprep.subr.bf16.mxu0 0
    %3024 = vmatpush1.bf16.msra.mxu0 %v2588
    %3025 = vmatprep.subr.bf16.mxu0 0
    %3026 = vmatpush1.bf16.msra.mxu0 %v2589
    %3027 = vmatprep.subr.bf16.mxu0 0
    %3028 = vmatpush1.bf16.msra.mxu0 %v2590
    %3029 = vmatprep.subr.bf16.mxu0 0
    %3030 = vmatpush1.bf16.msra.mxu0 %v2591
    %3031 = vmatprep.subr.bf16.mxu0 0
    %3032 = vmatpush1.bf16.msra.mxu0 %v2592
    %3033 = vmatprep.mubr.bf16.mxu0 %v1689
    %3034 = vmatmul.mubr.bf16.gmra.mrb[0].mxu0 %v1688
    %v3035 = vpop.f32.mrb[0].mxu0
    %v3036 = vadd.f32 %v2996, %v3035
    %v3037 = vpop.f32.mrb[0].mxu0
    %v3038 = vpop.f32.mrb[0].mxu0
    %v3039 = vpop.f32.mrb[0].mxu0
    %3040 = vdwg.mxu0
    %3041 = vst [vmem:[#allocation2] sm:$0x3] %v3036
    // Predicated region
    $region30: #{simclr_forward.1} parent=1 // pred_check
      _
    $region31: #{simclr_forward.1} parent=1 // pred_check_branch
      %3043 = sbr.rel (0) target = $region33
    $region32: #{simclr_forward.1} parent=1 // pred_region
      %s3045 = ssub.s32 32, 32
      %3046 = vsyncadd [#allocation3], %s3045
      %s3048 = sshll.u32 [#allocation2], 4
      %s3049 = int_to_ptr.vmem [resolvable:$true] %s3048
      %3051 = dma.vmem_to_hbm [thread:$0]  %s3049, 32, %s7, [#allocation3]
    $region33: #{simclr_forward.1} parent=1 // pred_fallthru
      _
    // Predicated region
    $region34: #{simclr_forward.1} parent=1 // pred_check
      _
    $region35: #{simclr_forward.1} parent=1 // pred_check_branch
      %3053 = sbr.rel (0) target = $region37
    $region36: #{simclr_forward.1} parent=1 // pred_region
      %3054 = dma.done [#allocation3], 32
    $region37: #{simclr_forward.1} parent=1 // pred_fallthru
      _
    %3055 = vsyncpa [#allocation3], 1

</llo_original>
